<compile_context>
chip_gen: v5e
topology: v5e:2x2
jax: 0.10.0
libtpu: 0.0.40
codegen_flags: <defaults>
</compile_context>

<pallas_src>
import functools
import numpy as np
import jax
import jax.numpy as jnp
from jax.experimental import pallas as pl
from jax.experimental.pallas import tpu as pltpu


# ----------------------------------------------------------------------------
# Trace-time weight / input repacking (wrapper side, exact, tiny)
# ----------------------------------------------------------------------------
def _round_up(n, m):
    return ((n + m - 1) // m) * m


def _band_weights(w, ow):
    """Torch conv weight (OC, IC, KH, KW) -> per-kh banded matrices.

    Returns A with shape (KH, W_in*IC, OW*OC) such that, for activations laid
    out with columns = (w*IC + ic),
        conv(x)[oh, ow*OC + oc] = sum_kh (x_row[oh+kh, :] @ A[kh])[ow*OC + oc].
    """
    oc, ic, kh, kw = w.shape
    w_in = ow + kw - 1
    wt = jnp.transpose(w, (2, 3, 1, 0))                          # (KH, KW, IC, OC)
    kidx = jnp.arange(w_in)[:, None] - jnp.arange(ow)[None, :]   # (W_in, OW)
    valid = ((kidx >= 0) & (kidx < kw)).astype(w.dtype)
    kidx = jnp.clip(kidx, 0, kw - 1)
    a = wt[:, kidx, :, :]                                        # (KH, W_in, OW, IC, OC)
    a = a * valid[None, :, :, None, None]
    a = jnp.transpose(a, (0, 1, 3, 2, 4))                        # (KH, W_in, IC, OW, OC)
    return a.reshape(kh, w_in * ic, ow * oc)


def _pool_col_select(n_w, c):
    """(2, n_w*c, (n_w//2)*c) 0/1 matrices picking even/odd spatial columns of a
    row laid out as (w*c + channel)."""
    t = np.zeros((2, n_w * c, (n_w // 2) * c), np.float32)
    wp = np.repeat(np.arange(n_w // 2), c)
    cc = np.tile(np.arange(c), n_w // 2)
    t[0, (2 * wp) * c + cc, wp * c + cc] = 1.0
    t[1, (2 * wp + 1) * c + cc, wp * c + cc] = 1.0
    return jnp.asarray(t)


# conv1 output rows (h = 0..23) reordered so that:
#   * 2x2 H-pooling of y1 is max(top half, bottom half)  (pairs (2j, 2j+1)),
#   * pooled rows come out parity-ordered in h/2: [0,2,4,6,8,10, 1,3,5,7,9,11],
#     which makes every conv2 kh-slice a contiguous block of 4 row-groups.
_ROW_PERM = np.array([0, 4, 8, 12, 16, 20, 2, 6, 10, 14, 18, 22,
                      1, 5, 9, 13, 17, 21, 3, 7, 11, 15, 19, 23], dtype=np.int32)

# p1 row-group position -> pooled h (derived from _ROW_PERM); used to place the
# conv2 banded matmul slices:  even conv2 output rows / odd conv2 output rows.
_CONV2_OFF_EVEN = (0, 6, 1, 7, 2)   # kh -> start row-group in p1
_CONV2_OFF_ODD = (6, 1, 7, 2, 8)


def _pack_conv1_input(x2, bt):
    """x2: (Bp, 28, 28) -> (nt, 24*bt, 140).

    Row q*bt + b of tile t holds the 5-row input band for conv1 output row
    h = _ROW_PERM[q] of image t*bt + b; column kh*28 + w = x2[img, h+kh, w].
    """
    bp = x2.shape[0]
    nt = bp // bt
    xs = jnp.stack([x2[:, kh:kh + 24, :] for kh in range(5)], axis=2)  # (Bp, 24, 5, 28)
    xs = xs[:, _ROW_PERM, :, :]                                        # q-ordered rows
    xs = xs.reshape(nt, bt, 24, 140)                                   # (t, b, q, kh*28+w)
    xs = jnp.transpose(xs, (0, 2, 1, 3))                               # (t, q, b, 140)
    return xs.reshape(nt, 24 * bt, 140)


# ----------------------------------------------------------------------------
# The single fused Pallas kernel (BT images per grid step)
# ----------------------------------------------------------------------------
def _net_kernel(x_ref, a1_ref, b1_ref, a2_ref, b2_ref, t1_ref, t2_ref,
                wfc1_ref, bfc1_ref, wfc2_ref, bfc2_ref, o_ref, *, bt):
    f32 = jnp.float32
    x = x_ref[0]                                                  # (24*bt, 140)

    # ---- conv1 (1->10, k=5): ONE banded matmul, rows already kh-stacked ----
    y1 = jnp.dot(x, a1_ref[...], preferred_element_type=f32) + b1_ref[...]   # (24*bt, 240)

    # ---- 2x2 max-pool: H via halves-max, W via column-select matmuls; ReLU ----
    ph = jnp.maximum(y1[:12 * bt, :], y1[12 * bt:, :])            # (12*bt, 240)
    p1 = jnp.maximum(jnp.dot(ph, t1_ref[0], preferred_element_type=f32),
                     jnp.dot(ph, t1_ref[1], preferred_element_type=f32))
    p1 = jnp.maximum(p1, 0.0)                                     # (12*bt, 120)

    # ---- conv2 (10->20, k=5): 5 banded matmuls per output-row parity ----
    # TODO(synk): nn.Dropout2d is identity in eval mode; train-mode dropout omitted.
    oe, oo = _CONV2_OFF_EVEN, _CONV2_OFF_ODD
    ye = jnp.dot(p1[oe[0] * bt:(oe[0] + 4) * bt, :], a2_ref[0],
                 preferred_element_type=f32)
    yo = jnp.dot(p1[oo[0] * bt:(oo[0] + 4) * bt, :], a2_ref[0],
                 preferred_element_type=f32)
    for kh in range(1, 5):
        ye = ye + jnp.dot(p1[oe[kh] * bt:(oe[kh] + 4) * bt, :], a2_ref[kh],
                          preferred_element_type=f32)
        yo = yo + jnp.dot(p1[oo[kh] * bt:(oo[kh] + 4) * bt, :], a2_ref[kh],
                          preferred_element_type=f32)

    # ---- 2x2 max-pool (H: even vs odd parity groups; W: select matmuls) + ReLU ----
    ph2 = jnp.maximum(ye, yo) + b2_ref[...]                       # (4*bt, 160)
    p2 = jnp.maximum(jnp.dot(ph2, t2_ref[0], preferred_element_type=f32),
                     jnp.dot(ph2, t2_ref[1], preferred_element_type=f32))
    p2 = jnp.maximum(p2, 0.0)                                     # (4*bt, 80)

    # ---- fc1 (320->50), batched: 4 matmuls of (bt,80)@(80,50) + ReLU ----
    h = jnp.dot(p2[0:bt, :], wfc1_ref[0], preferred_element_type=f32)
    for r in range(1, 4):
        h = h + jnp.dot(p2[r * bt:(r + 1) * bt, :], wfc1_ref[r],
                        preferred_element_type=f32)
    h = jnp.maximum(h + bfc1_ref[...], 0.0)                       # (bt, 50)
    # TODO(synk): F.dropout is identity in eval mode; train-mode dropout omitted.

    # ---- fc2 (50->10, padded to 128 lanes) + stable log_softmax ----
    # Padded lanes carry a -1e30 bias -> exp() == 0, so they never affect the
    # max / sum; the wrapper slices the first 10 lanes.
    z = jnp.dot(h, wfc2_ref[...], preferred_element_type=f32) + bfc2_ref[...]  # (bt, 128)
    m = jnp.max(z, axis=-1, keepdims=True)
    s = z - m
    lse = jnp.log(jnp.sum(jnp.exp(s), axis=-1, keepdims=True))
    o_ref[...] = s - lse                                          # lane-dense store


# ----------------------------------------------------------------------------
# Forward pass wrapper (single pallas_call, grid over batch tiles)
# ----------------------------------------------------------------------------
def net_forward(params, x, block_b=128):
    """x: (B, 1, 28, 28) NCHW float32 -> log-probs (B, 10)."""
    B = x.shape[0]
    bt = _round_up(min(block_b, _round_up(B, 8)), 8)              # tile size (mult of 8)
    Bp = _round_up(B, bt)
    nt = Bp // bt

    x2 = x[:, 0, :, :]                                            # (B, 28, 28), IC = 1
    if Bp > B:
        x2 = jnp.pad(x2, ((0, Bp - B), (0, 0), (0, 0)))
    x_cat = _pack_conv1_input(x2, bt)                             # (nt, 24*bt, 140)

    # Exact trace-time weight repacking (no matmuls -> no precision loss).
    a1 = _band_weights(params["conv1_w"], 24).reshape(140, 240)   # kh-concat along K
    b1 = jnp.tile(params["conv1_b"], 24).reshape(1, 240)
    a2 = _band_weights(params["conv2_w"], 8)                      # (5, 120, 160)
    b2 = jnp.tile(params["conv2_b"], 8).reshape(1, 160)
    t1 = _pool_col_select(24, 10)                                 # (2, 240, 120)
    t2 = _pool_col_select(8, 20)                                  # (2, 160, 80)
    # fc1 weight permuted so its rows match p2's (h, w*20 + c) layout.
    wfc1 = (params["fc1_w"].reshape(50, 20, 4, 4)
            .transpose(2, 3, 1, 0).reshape(4, 80, 50))
    bfc1 = params["fc1_b"].reshape(1, 50)
    # fc2 padded to 128 output lanes; pad bias = -1e30 so log_softmax ignores it.
    wfc2 = jnp.zeros((50, 128), jnp.float32).at[:, :10].set(params["fc2_w"].T)
    bfc2 = jnp.full((1, 128), -1e30, jnp.float32).at[:, :10].set(params["fc2_b"])

    consts = (a1, b1, a2, b2, t1, t2, wfc1, bfc1, wfc2, bfc2)

    def const_spec(arr):
        nd = arr.ndim
        return pl.BlockSpec(arr.shape, lambda i, _nd=nd: (0,) * _nd)

    out = pl.pallas_call(
        functools.partial(_net_kernel, bt=bt),
        out_shape=jax.ShapeDtypeStruct((Bp, 128), jnp.float32),
        grid=(nt,),
        in_specs=[pl.BlockSpec((1, 24 * bt, 140), lambda i: (i, 0, 0))]
                 + [const_spec(c) for c in consts],
        out_specs=pl.BlockSpec((bt, 128), lambda i: (i, 0)),
        compiler_params=pltpu.CompilerParams(
            dimension_semantics=("parallel",),
            vmem_limit_bytes=32 * 1024 * 1024),
    )(x_cat, *consts)
    return out[:B, :10]


# ----------------------------------------------------------------------------
# Parameters (deterministic, PyTorch-default-style uniform init)
# ----------------------------------------------------------------------------
def init_params(seed=42):
    key = jax.random.PRNGKey(seed)
    ks = jax.random.split(key, 8)

    def u(k, shape, fan_in):
        bound = 1.0 / jnp.sqrt(fan_in)
        return jax.random.uniform(k, shape, jnp.float32, -bound, bound)

    p = {}
    p["conv1_w"] = u(ks[0], (10, 1, 5, 5), 1 * 5 * 5)
    p["conv1_b"] = u(ks[1], (10,), 1 * 5 * 5)
    p["conv2_w"] = u(ks[2], (20, 10, 5, 5), 10 * 5 * 5)
    p["conv2_b"] = u(ks[3], (20,), 10 * 5 * 5)
    p["fc1_w"] = u(ks[4], (50, 320), 320)
    p["fc1_b"] = u(ks[5], (50,), 320)
    p["fc2_w"] = u(ks[6], (10, 50), 50)
    p["fc2_b"] = u(ks[7], (10,), 50)
    return p


# ----------------------------------------------------------------------------
# Pure-JAX reference (for correctness check only)
# ----------------------------------------------------------------------------
def net_forward_ref(params, x):
    hi = jax.lax.Precision.HIGHEST
    dn = ("NCHW", "OIHW", "NCHW")
    y = jax.lax.conv_general_dilated(x, params["conv1_w"], (1, 1), "VALID",
                                     dimension_numbers=dn, precision=hi)
    y = y + params["conv1_b"][None, :, None, None]
    y = jax.lax.reduce_window(y, -jnp.inf, jax.lax.max,
                              (1, 1, 2, 2), (1, 1, 2, 2), "VALID")
    y = jnp.maximum(y, 0.0)
    y = jax.lax.conv_general_dilated(y, params["conv2_w"], (1, 1), "VALID",
                                     dimension_numbers=dn, precision=hi)
    y = y + params["conv2_b"][None, :, None, None]
    y = jax.lax.reduce_window(y, -jnp.inf, jax.lax.max,
                              (1, 1, 2, 2), (1, 1, 2, 2), "VALID")
    y = jnp.maximum(y, 0.0)
    y = y.reshape(y.shape[0], -1)                                 # (B, 320), (C,H,W) order
    y = jnp.maximum(jnp.dot(y, params["fc1_w"].T, precision=hi) + params["fc1_b"], 0.0)
    z = jnp.dot(y, params["fc2_w"].T, precision=hi) + params["fc2_b"]
    return jax.nn.log_softmax(z, axis=-1)


if __name__ == "__main__":
    params = init_params(seed=42)

    # Small test: B=2 -> padded to one 8-image tile, single grid step.
    x = jax.random.normal(jax.random.PRNGKey(0), (2, 1, 28, 28), dtype=jnp.float32)
    logp = jax.block_until_ready(jax.jit(net_forward)(params, x))
    assert logp.shape == (2, 10)
    row_sums = jnp.sum(jnp.exp(logp), axis=-1)
    assert bool(jnp.all(jnp.abs(row_sums - 1.0) < 1e-4))
    ref = jax.block_until_ready(jax.jit(net_forward_ref)(params, x))
    max_err = float(jnp.max(jnp.abs(logp - ref)))
    assert max_err < 5e-2, f"kernel/reference mismatch: {max_err}"

    # Multi-tile test: B=18 with tile size 8 -> 3 grid steps + batch padding.
    x2 = jax.random.normal(jax.random.PRNGKey(1), (18, 1, 28, 28), dtype=jnp.float32)
    fwd_small_tiles = jax.jit(functools.partial(net_forward, block_b=8))
    logp2 = jax.block_until_ready(fwd_small_tiles(params, x2))
    ref2 = jax.block_until_ready(jax.jit(net_forward_ref)(params, x2))
    max_err2 = float(jnp.max(jnp.abs(logp2 - ref2)))
    assert max_err2 < 5e-2, f"kernel/reference mismatch (multi-tile): {max_err2}"

    print("KERNEL_OK")
</pallas_src>

<mosaic_0001>
module attributes {stable_mosaic.version = 11 : i64} {
  func.func @_net_kernel(%arg0: i32, %arg1: memref<1x192x140xf32, #tpu.memory_space<vmem>>, %arg2: memref<140x240xf32, #tpu.memory_space<vmem>>, %arg3: memref<1x240xf32, #tpu.memory_space<vmem>>, %arg4: memref<5x120x160xf32, #tpu.memory_space<vmem>>, %arg5: memref<1x160xf32, #tpu.memory_space<vmem>>, %arg6: memref<2x240x120xf32, #tpu.memory_space<vmem>>, %arg7: memref<2x160x80xf32, #tpu.memory_space<vmem>>, %arg8: memref<4x80x50xf32, #tpu.memory_space<vmem>>, %arg9: memref<1x50xf32, #tpu.memory_space<vmem>>, %arg10: memref<50x128xf32, #tpu.memory_space<vmem>>, %arg11: memref<1x128xf32, #tpu.memory_space<vmem>>, %arg12: memref<8x128xf32, #tpu.memory_space<vmem>>) attributes {dimension_semantics = [#tpu.dimension_semantics<parallel>], iteration_bounds = array<i64: 1>, scalar_prefetch = 0 : i64, scratch_operands = 0 : i64, tpu.core_type = #tpu.core_type<tc>, window_params = [{transform_indices = @transform_0, window_bounds = array<i64: 1, 192, 140>}, {pipeline_mode = #tpu.pipeline_mode<synchronous>, transform_indices = @transform_1, window_bounds = array<i64: 140, 240>}, {pipeline_mode = #tpu.pipeline_mode<synchronous>, transform_indices = @transform_2, window_bounds = array<i64: 1, 240>}, {pipeline_mode = #tpu.pipeline_mode<synchronous>, transform_indices = @transform_3, window_bounds = array<i64: 5, 120, 160>}, {pipeline_mode = #tpu.pipeline_mode<synchronous>, transform_indices = @transform_4, window_bounds = array<i64: 1, 160>}, {pipeline_mode = #tpu.pipeline_mode<synchronous>, transform_indices = @transform_5, window_bounds = array<i64: 2, 240, 120>}, {pipeline_mode = #tpu.pipeline_mode<synchronous>, transform_indices = @transform_6, window_bounds = array<i64: 2, 160, 80>}, {pipeline_mode = #tpu.pipeline_mode<synchronous>, transform_indices = @transform_7, window_bounds = array<i64: 4, 80, 50>}, {pipeline_mode = #tpu.pipeline_mode<synchronous>, transform_indices = @transform_8, window_bounds = array<i64: 1, 50>}, {pipeline_mode = #tpu.pipeline_mode<synchronous>, transform_indices = @transform_9, window_bounds = array<i64: 50, 128>}, {pipeline_mode = #tpu.pipeline_mode<synchronous>, transform_indices = @transform_10, window_bounds = array<i64: 1, 128>}, {transform_indices = @transform_11, window_bounds = array<i64: 8, 128>}]} {
    %c0 = arith.constant 0 : index
    %c0_0 = arith.constant 0 : index
    %c0_1 = arith.constant 0 : index
    %0 = vector.load %arg1[%c0, %c0_0, %c0_1] : memref<1x192x140xf32, #tpu.memory_space<vmem>>, vector<1x192x140xf32>
    %1 = vector.shape_cast %0 : vector<1x192x140xf32> to vector<192x140xf32>
    %c0_2 = arith.constant 0 : index
    %c0_3 = arith.constant 0 : index
    %2 = vector.load %arg2[%c0_2, %c0_3] : memref<140x240xf32, #tpu.memory_space<vmem>>, vector<140x240xf32>
    %cst = arith.constant dense<0.000000e+00> : vector<192x240xf32>
    %3 = tpu.matmul %1, %2, %cst {dimension_numbers = #tpu.dot_dimension_numbers<[1], [0], [0], [1], [0, 0, 1, 1], [], []>} : vector<192x140xf32>, vector<140x240xf32>, vector<192x240xf32> -> vector<192x240xf32>
    %c0_4 = arith.constant 0 : index
    %c0_5 = arith.constant 0 : index
    %4 = vector.load %arg3[%c0_4, %c0_5] : memref<1x240xf32, #tpu.memory_space<vmem>>, vector<1x240xf32>
    %5 = vector.broadcast %4 : vector<1x240xf32> to vector<192x240xf32>
    %6 = arith.addf %3, %5 : vector<192x240xf32>
    %7 = vector.extract_strided_slice %6 {offsets = [0, 0], sizes = [96, 240], strides = [1, 1]} : vector<192x240xf32> to vector<96x240xf32>
    %8 = vector.extract_strided_slice %6 {offsets = [96, 0], sizes = [96, 240], strides = [1, 1]} : vector<192x240xf32> to vector<96x240xf32>
    %9 = arith.maximumf %7, %8 : vector<96x240xf32>
    %c0_6 = arith.constant 0 : index
    %c0_7 = arith.constant 0 : index
    %c0_8 = arith.constant 0 : index
    %10 = vector.load %arg6[%c0_6, %c0_7, %c0_8] : memref<2x240x120xf32, #tpu.memory_space<vmem>>, vector<1x240x120xf32>
    %11 = vector.shape_cast %10 : vector<1x240x120xf32> to vector<240x120xf32>
    %cst_9 = arith.constant dense<0.000000e+00> : vector<96x120xf32>
    %12 = tpu.matmul %9, %11, %cst_9 {dimension_numbers = #tpu.dot_dimension_numbers<[1], [0], [0], [1], [0, 0, 1, 1], [], []>} : vector<96x240xf32>, vector<240x120xf32>, vector<96x120xf32> -> vector<96x120xf32>
    %c1 = arith.constant 1 : index
    %c0_10 = arith.constant 0 : index
    %c0_11 = arith.constant 0 : index
    %13 = vector.load %arg6[%c1, %c0_10, %c0_11] : memref<2x240x120xf32, #tpu.memory_space<vmem>>, vector<1x240x120xf32>
    %14 = vector.shape_cast %13 : vector<1x240x120xf32> to vector<240x120xf32>
    %cst_12 = arith.constant dense<0.000000e+00> : vector<96x120xf32>
    %15 = tpu.matmul %9, %14, %cst_12 {dimension_numbers = #tpu.dot_dimension_numbers<[1], [0], [0], [1], [0, 0, 1, 1], [], []>} : vector<96x240xf32>, vector<240x120xf32>, vector<96x120xf32> -> vector<96x120xf32>
    %16 = arith.maximumf %12, %15 : vector<96x120xf32>
    %cst_13 = arith.constant 0.000000e+00 : f32
    %17 = vector.broadcast %cst_13 : f32 to vector<96x120xf32>
    %18 = arith.maximumf %16, %17 : vector<96x120xf32>
    %19 = vector.extract_strided_slice %18 {offsets = [0, 0], sizes = [32, 120], strides = [1, 1]} : vector<96x120xf32> to vector<32x120xf32>
    %c0_14 = arith.constant 0 : index
    %c0_15 = arith.constant 0 : index
    %c0_16 = arith.constant 0 : index
    %20 = vector.load %arg4[%c0_14, %c0_15, %c0_16] : memref<5x120x160xf32, #tpu.memory_space<vmem>>, vector<1x120x160xf32>
    %21 = vector.shape_cast %20 : vector<1x120x160xf32> to vector<120x160xf32>
    %cst_17 = arith.constant dense<0.000000e+00> : vector<32x160xf32>
    %22 = tpu.matmul %19, %21, %cst_17 {dimension_numbers = #tpu.dot_dimension_numbers<[1], [0], [0], [1], [0, 0, 1, 1], [], []>} : vector<32x120xf32>, vector<120x160xf32>, vector<32x160xf32> -> vector<32x160xf32>
    %23 = vector.extract_strided_slice %18 {offsets = [48, 0], sizes = [32, 120], strides = [1, 1]} : vector<96x120xf32> to vector<32x120xf32>
    %c0_18 = arith.constant 0 : index
    %c0_19 = arith.constant 0 : index
    %c0_20 = arith.constant 0 : index
    %24 = vector.load %arg4[%c0_18, %c0_19, %c0_20] : memref<5x120x160xf32, #tpu.memory_space<vmem>>, vector<1x120x160xf32>
    %25 = vector.shape_cast %24 : vector<1x120x160xf32> to vector<120x160xf32>
    %cst_21 = arith.constant dense<0.000000e+00> : vector<32x160xf32>
    %26 = tpu.matmul %23, %25, %cst_21 {dimension_numbers = #tpu.dot_dimension_numbers<[1], [0], [0], [1], [0, 0, 1, 1], [], []>} : vector<32x120xf32>, vector<120x160xf32>, vector<32x160xf32> -> vector<32x160xf32>
    %27 = vector.extract_strided_slice %18 {offsets = [48, 0], sizes = [32, 120], strides = [1, 1]} : vector<96x120xf32> to vector<32x120xf32>
    %c1_22 = arith.constant 1 : index
    %c0_23 = arith.constant 0 : index
    %c0_24 = arith.constant 0 : index
    %28 = vector.load %arg4[%c1_22, %c0_23, %c0_24] : memref<5x120x160xf32, #tpu.memory_space<vmem>>, vector<1x120x160xf32>
    %29 = vector.shape_cast %28 : vector<1x120x160xf32> to vector<120x160xf32>
    %cst_25 = arith.constant dense<0.000000e+00> : vector<32x160xf32>
    %30 = tpu.matmul %27, %29, %cst_25 {dimension_numbers = #tpu.dot_dimension_numbers<[1], [0], [0], [1], [0, 0, 1, 1], [], []>} : vector<32x120xf32>, vector<120x160xf32>, vector<32x160xf32> -> vector<32x160xf32>
    %31 = arith.addf %22, %30 : vector<32x160xf32>
    %32 = vector.extract_strided_slice %18 {offsets = [8, 0], sizes = [32, 120], strides = [1, 1]} : vector<96x120xf32> to vector<32x120xf32>
    %c1_26 = arith.constant 1 : index
    %c0_27 = arith.constant 0 : index
    %c0_28 = arith.constant 0 : index
    %33 = vector.load %arg4[%c1_26, %c0_27, %c0_28] : memref<5x120x160xf32, #tpu.memory_space<vmem>>, vector<1x120x160xf32>
    %34 = vector.shape_cast %33 : vector<1x120x160xf32> to vector<120x160xf32>
    %cst_29 = arith.constant dense<0.000000e+00> : vector<32x160xf32>
    %35 = tpu.matmul %32, %34, %cst_29 {dimension_numbers = #tpu.dot_dimension_numbers<[1], [0], [0], [1], [0, 0, 1, 1], [], []>} : vector<32x120xf32>, vector<120x160xf32>, vector<32x160xf32> -> vector<32x160xf32>
    %36 = arith.addf %26, %35 : vector<32x160xf32>
    %37 = vector.extract_strided_slice %18 {offsets = [8, 0], sizes = [32, 120], strides = [1, 1]} : vector<96x120xf32> to vector<32x120xf32>
    %c2 = arith.constant 2 : index
    %c0_30 = arith.constant 0 : index
    %c0_31 = arith.constant 0 : index
    %38 = vector.load %arg4[%c2, %c0_30, %c0_31] : memref<5x120x160xf32, #tpu.memory_space<vmem>>, vector<1x120x160xf32>
    %39 = vector.shape_cast %38 : vector<1x120x160xf32> to vector<120x160xf32>
    %cst_32 = arith.constant dense<0.000000e+00> : vector<32x160xf32>
    %40 = tpu.matmul %37, %39, %cst_32 {dimension_numbers = #tpu.dot_dimension_numbers<[1], [0], [0], [1], [0, 0, 1, 1], [], []>} : vector<32x120xf32>, vector<120x160xf32>, vector<32x160xf32> -> vector<32x160xf32>
    %41 = arith.addf %31, %40 : vector<32x160xf32>
    %42 = vector.extract_strided_slice %18 {offsets = [56, 0], sizes = [32, 120], strides = [1, 1]} : vector<96x120xf32> to vector<32x120xf32>
    %c2_33 = arith.constant 2 : index
    %c0_34 = arith.constant 0 : index
    %c0_35 = arith.constant 0 : index
    %43 = vector.load %arg4[%c2_33, %c0_34, %c0_35] : memref<5x120x160xf32, #tpu.memory_space<vmem>>, vector<1x120x160xf32>
    %44 = vector.shape_cast %43 : vector<1x120x160xf32> to vector<120x160xf32>
    %cst_36 = arith.constant dense<0.000000e+00> : vector<32x160xf32>
    %45 = tpu.matmul %42, %44, %cst_36 {dimension_numbers = #tpu.dot_dimension_numbers<[1], [0], [0], [1], [0, 0, 1, 1], [], []>} : vector<32x120xf32>, vector<120x160xf32>, vector<32x160xf32> -> vector<32x160xf32>
    %46 = arith.addf %36, %45 : vector<32x160xf32>
    %47 = vector.extract_strided_slice %18 {offsets = [56, 0], sizes = [32, 120], strides = [1, 1]} : vector<96x120xf32> to vector<32x120xf32>
    %c3 = arith.constant 3 : index
    %c0_37 = arith.constant 0 : index
    %c0_38 = arith.constant 0 : index
    %48 = vector.load %arg4[%c3, %c0_37, %c0_38] : memref<5x120x160xf32, #tpu.memory_space<vmem>>, vector<1x120x160xf32>
    %49 = vector.shape_cast %48 : vector<1x120x160xf32> to vector<120x160xf32>
    %cst_39 = arith.constant dense<0.000000e+00> : vector<32x160xf32>
    %50 = tpu.matmul %47, %49, %cst_39 {dimension_numbers = #tpu.dot_dimension_numbers<[1], [0], [0], [1], [0, 0, 1, 1], [], []>} : vector<32x120xf32>, vector<120x160xf32>, vector<32x160xf32> -> vector<32x160xf32>
    %51 = arith.addf %41, %50 : vector<32x160xf32>
    %52 = vector.extract_strided_slice %18 {offsets = [16, 0], sizes = [32, 120], strides = [1, 1]} : vector<96x120xf32> to vector<32x120xf32>
    %c3_40 = arith.constant 3 : index
    %c0_41 = arith.constant 0 : index
    %c0_42 = arith.constant 0 : index
    %53 = vector.load %arg4[%c3_40, %c0_41, %c0_42] : memref<5x120x160xf32, #tpu.memory_space<vmem>>, vector<1x120x160xf32>
    %54 = vector.shape_cast %53 : vector<1x120x160xf32> to vector<120x160xf32>
    %cst_43 = arith.constant dense<0.000000e+00> : vector<32x160xf32>
    %55 = tpu.matmul %52, %54, %cst_43 {dimension_numbers = #tpu.dot_dimension_numbers<[1], [0], [0], [1], [0, 0, 1, 1], [], []>} : vector<32x120xf32>, vector<120x160xf32>, vector<32x160xf32> -> vector<32x160xf32>
    %56 = arith.addf %46, %55 : vector<32x160xf32>
    %57 = vector.extract_strided_slice %18 {offsets = [16, 0], sizes = [32, 120], strides = [1, 1]} : vector<96x120xf32> to vector<32x120xf32>
    %c4 = arith.constant 4 : index
    %c0_44 = arith.constant 0 : index
    %c0_45 = arith.constant 0 : index
    %58 = vector.load %arg4[%c4, %c0_44, %c0_45] : memref<5x120x160xf32, #tpu.memory_space<vmem>>, vector<1x120x160xf32>
    %59 = vector.shape_cast %58 : vector<1x120x160xf32> to vector<120x160xf32>
    %cst_46 = arith.constant dense<0.000000e+00> : vector<32x160xf32>
    %60 = tpu.matmul %57, %59, %cst_46 {dimension_numbers = #tpu.dot_dimension_numbers<[1], [0], [0], [1], [0, 0, 1, 1], [], []>} : vector<32x120xf32>, vector<120x160xf32>, vector<32x160xf32> -> vector<32x160xf32>
    %61 = arith.addf %51, %60 : vector<32x160xf32>
    %62 = vector.extract_strided_slice %18 {offsets = [64, 0], sizes = [32, 120], strides = [1, 1]} : vector<96x120xf32> to vector<32x120xf32>
    %c4_47 = arith.constant 4 : index
    %c0_48 = arith.constant 0 : index
    %c0_49 = arith.constant 0 : index
    %63 = vector.load %arg4[%c4_47, %c0_48, %c0_49] : memref<5x120x160xf32, #tpu.memory_space<vmem>>, vector<1x120x160xf32>
    %64 = vector.shape_cast %63 : vector<1x120x160xf32> to vector<120x160xf32>
    %cst_50 = arith.constant dense<0.000000e+00> : vector<32x160xf32>
    %65 = tpu.matmul %62, %64, %cst_50 {dimension_numbers = #tpu.dot_dimension_numbers<[1], [0], [0], [1], [0, 0, 1, 1], [], []>} : vector<32x120xf32>, vector<120x160xf32>, vector<32x160xf32> -> vector<32x160xf32>
    %66 = arith.addf %56, %65 : vector<32x160xf32>
    %67 = arith.maximumf %61, %66 : vector<32x160xf32>
    %c0_51 = arith.constant 0 : index
    %c0_52 = arith.constant 0 : index
    %68 = vector.load %arg5[%c0_51, %c0_52] : memref<1x160xf32, #tpu.memory_space<vmem>>, vector<1x160xf32>
    %69 = vector.broadcast %68 : vector<1x160xf32> to vector<32x160xf32>
    %70 = arith.addf %67, %69 : vector<32x160xf32>
    %c0_53 = arith.constant 0 : index
    %c0_54 = arith.constant 0 : index
    %c0_55 = arith.constant 0 : index
    %71 = vector.load %arg7[%c0_53, %c0_54, %c0_55] : memref<2x160x80xf32, #tpu.memory_space<vmem>>, vector<1x160x80xf32>
    %72 = vector.shape_cast %71 : vector<1x160x80xf32> to vector<160x80xf32>
    %cst_56 = arith.constant dense<0.000000e+00> : vector<32x80xf32>
    %73 = tpu.matmul %70, %72, %cst_56 {dimension_numbers = #tpu.dot_dimension_numbers<[1], [0], [0], [1], [0, 0, 1, 1], [], []>} : vector<32x160xf32>, vector<160x80xf32>, vector<32x80xf32> -> vector<32x80xf32>
    %c1_57 = arith.constant 1 : index
    %c0_58 = arith.constant 0 : index
    %c0_59 = arith.constant 0 : index
    %74 = vector.load %arg7[%c1_57, %c0_58, %c0_59] : memref<2x160x80xf32, #tpu.memory_space<vmem>>, vector<1x160x80xf32>
    %75 = vector.shape_cast %74 : vector<1x160x80xf32> to vector<160x80xf32>
    %cst_60 = arith.constant dense<0.000000e+00> : vector<32x80xf32>
    %76 = tpu.matmul %70, %75, %cst_60 {dimension_numbers = #tpu.dot_dimension_numbers<[1], [0], [0], [1], [0, 0, 1, 1], [], []>} : vector<32x160xf32>, vector<160x80xf32>, vector<32x80xf32> -> vector<32x80xf32>
    %77 = arith.maximumf %73, %76 : vector<32x80xf32>
    %cst_61 = arith.constant 0.000000e+00 : f32
    %78 = vector.broadcast %cst_61 : f32 to vector<32x80xf32>
    %79 = arith.maximumf %77, %78 : vector<32x80xf32>
    %80 = vector.extract_strided_slice %79 {offsets = [0, 0], sizes = [8, 80], strides = [1, 1]} : vector<32x80xf32> to vector<8x80xf32>
    %c0_62 = arith.constant 0 : index
    %c0_63 = arith.constant 0 : index
    %c0_64 = arith.constant 0 : index
    %81 = vector.load %arg8[%c0_62, %c0_63, %c0_64] : memref<4x80x50xf32, #tpu.memory_space<vmem>>, vector<1x80x50xf32>
    %82 = vector.shape_cast %81 : vector<1x80x50xf32> to vector<80x50xf32>
    %cst_65 = arith.constant dense<0.000000e+00> : vector<8x50xf32>
    %83 = tpu.matmul %80, %82, %cst_65 {dimension_numbers = #tpu.dot_dimension_numbers<[1], [0], [0], [1], [0, 0, 1, 1], [], []>} : vector<8x80xf32>, vector<80x50xf32>, vector<8x50xf32> -> vector<8x50xf32>
    %84 = vector.extract_strided_slice %79 {offsets = [8, 0], sizes = [8, 80], strides = [1, 1]} : vector<32x80xf32> to vector<8x80xf32>
    %c1_66 = arith.constant 1 : index
    %c0_67 = arith.constant 0 : index
    %c0_68 = arith.constant 0 : index
    %85 = vector.load %arg8[%c1_66, %c0_67, %c0_68] : memref<4x80x50xf32, #tpu.memory_space<vmem>>, vector<1x80x50xf32>
    %86 = vector.shape_cast %85 : vector<1x80x50xf32> to vector<80x50xf32>
    %cst_69 = arith.constant dense<0.000000e+00> : vector<8x50xf32>
    %87 = tpu.matmul %84, %86, %cst_69 {dimension_numbers = #tpu.dot_dimension_numbers<[1], [0], [0], [1], [0, 0, 1, 1], [], []>} : vector<8x80xf32>, vector<80x50xf32>, vector<8x50xf32> -> vector<8x50xf32>
    %88 = arith.addf %83, %87 : vector<8x50xf32>
    %89 = vector.extract_strided_slice %79 {offsets = [16, 0], sizes = [8, 80], strides = [1, 1]} : vector<32x80xf32> to vector<8x80xf32>
    %c2_70 = arith.constant 2 : index
    %c0_71 = arith.constant 0 : index
    %c0_72 = arith.constant 0 : index
    %90 = vector.load %arg8[%c2_70, %c0_71, %c0_72] : memref<4x80x50xf32, #tpu.memory_space<vmem>>, vector<1x80x50xf32>
    %91 = vector.shape_cast %90 : vector<1x80x50xf32> to vector<80x50xf32>
    %cst_73 = arith.constant dense<0.000000e+00> : vector<8x50xf32>
    %92 = tpu.matmul %89, %91, %cst_73 {dimension_numbers = #tpu.dot_dimension_numbers<[1], [0], [0], [1], [0, 0, 1, 1], [], []>} : vector<8x80xf32>, vector<80x50xf32>, vector<8x50xf32> -> vector<8x50xf32>
    %93 = arith.addf %88, %92 : vector<8x50xf32>
    %94 = vector.extract_strided_slice %79 {offsets = [24, 0], sizes = [8, 80], strides = [1, 1]} : vector<32x80xf32> to vector<8x80xf32>
    %c3_74 = arith.constant 3 : index
    %c0_75 = arith.constant 0 : index
    %c0_76 = arith.constant 0 : index
    %95 = vector.load %arg8[%c3_74, %c0_75, %c0_76] : memref<4x80x50xf32, #tpu.memory_space<vmem>>, vector<1x80x50xf32>
    %96 = vector.shape_cast %95 : vector<1x80x50xf32> to vector<80x50xf32>
    %cst_77 = arith.constant dense<0.000000e+00> : vector<8x50xf32>
    %97 = tpu.matmul %94, %96, %cst_77 {dimension_numbers = #tpu.dot_dimension_numbers<[1], [0], [0], [1], [0, 0, 1, 1], [], []>} : vector<8x80xf32>, vector<80x50xf32>, vector<8x50xf32> -> vector<8x50xf32>
    %98 = arith.addf %93, %97 : vector<8x50xf32>
    %c0_78 = arith.constant 0 : index
    %c0_79 = arith.constant 0 : index
    %99 = vector.load %arg9[%c0_78, %c0_79] : memref<1x50xf32, #tpu.memory_space<vmem>>, vector<1x50xf32>
    %100 = vector.broadcast %99 : vector<1x50xf32> to vector<8x50xf32>
    %101 = arith.addf %98, %100 : vector<8x50xf32>
    %cst_80 = arith.constant 0.000000e+00 : f32
    %102 = vector.broadcast %cst_80 : f32 to vector<8x50xf32>
    %103 = arith.maximumf %101, %102 : vector<8x50xf32>
    %c0_81 = arith.constant 0 : index
    %c0_82 = arith.constant 0 : index
    %104 = vector.load %arg10[%c0_81, %c0_82] : memref<50x128xf32, #tpu.memory_space<vmem>>, vector<50x128xf32>
    %cst_83 = arith.constant dense<0.000000e+00> : vector<8x128xf32>
    %105 = tpu.matmul %103, %104, %cst_83 {dimension_numbers = #tpu.dot_dimension_numbers<[1], [0], [0], [1], [0, 0, 1, 1], [], []>} : vector<8x50xf32>, vector<50x128xf32>, vector<8x128xf32> -> vector<8x128xf32>
    %c0_84 = arith.constant 0 : index
    %c0_85 = arith.constant 0 : index
    %106 = vector.load %arg11[%c0_84, %c0_85] : memref<1x128xf32, #tpu.memory_space<vmem>>, vector<1x128xf32>
    %107 = vector.broadcast %106 : vector<1x128xf32> to vector<8x128xf32>
    %108 = arith.addf %105, %107 : vector<8x128xf32>
    %cst_86 = arith.constant dense<0xFF800000> : vector<8xf32>
    %109 = vector.multi_reduction <maximumf>, %108, %cst_86 [1] : vector<8x128xf32> to vector<8xf32>
    %110 = vector.shape_cast %109 : vector<8xf32> to vector<8x1xf32>
    %111 = vector.broadcast %110 : vector<8x1xf32> to vector<8x128xf32>
    %112 = arith.subf %108, %111 : vector<8x128xf32>
    %113 = math.exp %112 : vector<8x128xf32>
    %cst_87 = arith.constant dense<0.000000e+00> : vector<8xf32>
    %114 = vector.multi_reduction <add>, %113, %cst_87 [1] : vector<8x128xf32> to vector<8xf32>
    %115 = vector.shape_cast %114 : vector<8xf32> to vector<8x1xf32>
    %116 = math.log %115 : vector<8x1xf32>
    %117 = vector.broadcast %116 : vector<8x1xf32> to vector<8x128xf32>
    %118 = arith.subf %112, %117 : vector<8x128xf32>
    %c0_88 = arith.constant 0 : index
    %c0_89 = arith.constant 0 : index
    %119 = vector.load %arg12[%c0_88, %c0_89] : memref<8x128xf32, #tpu.memory_space<vmem>>, vector<8x128xf32>
    tpu.vector_store %arg12[%c0_88, %c0_89], %118 {strides = array<i32>} : memref<8x128xf32, #tpu.memory_space<vmem>>, vector<8x128xf32>,
    return
  }
  func.func @transform_0(%arg0: i32) -> (i32, i32, i32) {
    %c0_i32 = arith.constant 0 : i32
    %c0_i32_0 = arith.constant 0 : i32
    %c0_i32_1 = arith.constant 0 : i32
    return %arg0, %c0_i32, %c0_i32_0 : i32, i32, i32
  }
  func.func @transform_1(%arg0: i32) -> (i32, i32) {
    %c0_i32 = arith.constant 0 : i32
    %c0_i32_0 = arith.constant 0 : i32
    %c0_i32_1 = arith.constant 0 : i32
    return %c0_i32, %c0_i32_0 : i32, i32
  }
  func.func @transform_2(%arg0: i32) -> (i32, i32) {
    %c0_i32 = arith.constant 0 : i32
    %c0_i32_0 = arith.constant 0 : i32
    %c0_i32_1 = arith.constant 0 : i32
    return %c0_i32, %c0_i32_0 : i32, i32
  }
  func.func @transform_3(%arg0: i32) -> (i32, i32, i32) {
    %c0_i32 = arith.constant 0 : i32
    %c0_i32_0 = arith.constant 0 : i32
    %c0_i32_1 = arith.constant 0 : i32
    %c0_i32_2 = arith.constant 0 : i32
    return %c0_i32, %c0_i32_0, %c0_i32_1 : i32, i32, i32
  }
  func.func @transform_4(%arg0: i32) -> (i32, i32) {
    %c0_i32 = arith.constant 0 : i32
    %c0_i32_0 = arith.constant 0 : i32
    %c0_i32_1 = arith.constant 0 : i32
    return %c0_i32, %c0_i32_0 : i32, i32
  }
  func.func @transform_5(%arg0: i32) -> (i32, i32, i32) {
    %c0_i32 = arith.constant 0 : i32
    %c0_i32_0 = arith.constant 0 : i32
    %c0_i32_1 = arith.constant 0 : i32
    %c0_i32_2 = arith.constant 0 : i32
    return %c0_i32, %c0_i32_0, %c0_i32_1 : i32, i32, i32
  }
  func.func @transform_6(%arg0: i32) -> (i32, i32, i32) {
    %c0_i32 = arith.constant 0 : i32
    %c0_i32_0 = arith.constant 0 : i32
    %c0_i32_1 = arith.constant 0 : i32
    %c0_i32_2 = arith.constant 0 : i32
    return %c0_i32, %c0_i32_0, %c0_i32_1 : i32, i32, i32
  }
  func.func @transform_7(%arg0: i32) -> (i32, i32, i32) {
    %c0_i32 = arith.constant 0 : i32
    %c0_i32_0 = arith.constant 0 : i32
    %c0_i32_1 = arith.constant 0 : i32
    %c0_i32_2 = arith.constant 0 : i32
    return %c0_i32, %c0_i32_0, %c0_i32_1 : i32, i32, i32
  }
  func.func @transform_8(%arg0: i32) -> (i32, i32) {
    %c0_i32 = arith.constant 0 : i32
    %c0_i32_0 = arith.constant 0 : i32
    %c0_i32_1 = arith.constant 0 : i32
    return %c0_i32, %c0_i32_0 : i32, i32
  }
  func.func @transform_9(%arg0: i32) -> (i32, i32) {
    %c0_i32 = arith.constant 0 : i32
    %c0_i32_0 = arith.constant 0 : i32
    %c0_i32_1 = arith.constant 0 : i32
    return %c0_i32, %c0_i32_0 : i32, i32
  }
  func.func @transform_10(%arg0: i32) -> (i32, i32) {
    %c0_i32 = arith.constant 0 : i32
    %c0_i32_0 = arith.constant 0 : i32
    %c0_i32_1 = arith.constant 0 : i32
    return %c0_i32, %c0_i32_0 : i32, i32
  }
  func.func @transform_11(%arg0: i32) -> (i32, i32) {
    %c0_i32 = arith.constant 0 : i32
    %c0_i32_0 = arith.constant 0 : i32
    return %arg0, %c0_i32 : i32, i32
  }
}

</mosaic_0001>

<llo_original>
// kernel: tile.13
$region0: #{tile.13}
  #allocation0 [shape = 's32[1]{0}', space=sflag, size = 0x4, scoped, tag = 'scoped memory for tile.13']
  %s0 = inlined_call_operand.vmem [shape: f32[10], index: 0, kind: input, shape index: {}]
  %s1 = inlined_call_operand.vmem [shape: f32[24,10], index: 1, kind: output, shape index: {}]
  // Predicated region
  $region2: #{tile.13} parent=0 // pred_check
    _
  $region3: #{tile.13} parent=0 // pred_check_branch
    %3 = sbr.rel (0) target = $region5
  $region4: #{tile.13} parent=0 // pred_region
    _
  $region5: #{tile.13} parent=0 // pred_fallthru
    _
  %v4 = vld [vmem:[%s0] ss:$0 sm:$0xff]
  %5 = vst [vmem:[%s1] sm:$0xff] %v4
  %s6 = scalar_lea.vmem %s1, 8
  %7 = vst [vmem:[%s6] sm:$0xff] %v4
  %s8 = scalar_lea.vmem %s1, 16
  %9 = vst [vmem:[%s8] sm:$0xff] %v4

// kernel: tile.14
$region0: #{tile.14}
  %s0 = inlined_call_operand.vmem [shape: f32[24,10], index: 0, kind: input, shape index: {}]
  %s1 = inlined_call_operand.vmem [shape: f32[1,240], index: 1, kind: output, shape index: {}]
  $region1: #{tile.14} parent=0
    #allocation0 [shape = 'u8[8192]{0}', space=vmem, size = 0x2000, scoped, tag = 'scoped mem for output reshape']
    %v2 = vld [vmem:[%s0] sm:$0x1]
    %vm3 = vcmask 80896
    %4 = vst.msk [vmem:[#allocation0] sm:$0x1] %vm3, %v2
    %s5 = scalar_lea.vmem %s0, 12
    %v6 = vld [vmem:[%s5] sm:$0x1]
    %s7 = scalar_lea.vmem %s0, 12
    %v8 = vld [vmem:[%s7] sm:$0x1]
    %vm9 = vcmask 64512
    %v10 = vsel %vm9, %v8, %v6
    %11 = vrot.lane.b32.xlu0 %v10, 120
    %v12 = vpop.permute.xlu0 %11
    %vm13 = vcmask 15360
    %s14 = scalar_lea.vmem [#allocation0], 8
    %15 = vst.msk [vmem:[%s14] sm:$0x1] %vm13, %v12
    %vm16 = vcmask 1048512
    %17 = vst.msk [vmem:[#allocation0] sm:$0x1] %vm16, %v12
    %s18 = scalar_lea.vmem %s0, 11
    %v19 = vld [vmem:[%s18] sm:$0x1]
    %20 = vrot.lane.b32.xlu0 %v19, 110
    %v21 = vpop.permute.xlu0 %20
    %vm22 = vcmask 982896
    %23 = vst.msk [vmem:[#allocation0] sm:$0x1] %vm22, %v21
    %s24 = scalar_lea.vmem %s0, 23
    %v25 = vld [vmem:[%s24] sm:$0x1]
    %26 = vrot.lane.b32.xlu0 %v25, 102
    %v27 = vpop.permute.xlu0 %26
    %vm28 = vcmask 917296
    %s29 = scalar_lea.vmem [#allocation0], 8
    %30 = vst.msk [vmem:[%s29] sm:$0x1] %vm28, %v27
    %s31 = scalar_lea.vmem %s0, 10
    %v32 = vld [vmem:[%s31] sm:$0x1]
    %33 = vrot.lane.b32.xlu0 %v32, 100
    %v34 = vpop.permute.xlu0 %33
    %vm35 = vcmask 900896
    %36 = vst.msk [vmem:[#allocation0] sm:$0x1] %vm35, %v34
    %s37 = scalar_lea.vmem %s0, 22
    %v38 = vld [vmem:[%s37] sm:$0x1]
    %39 = vrot.lane.b32.xlu0 %v38, 92
    %v40 = vpop.permute.xlu0 %39
    %vm41 = vcmask 835296
    %s42 = scalar_lea.vmem [#allocation0], 8
    %43 = vst.msk [vmem:[%s42] sm:$0x1] %vm41, %v40
    %s44 = scalar_lea.vmem %s0, 9
    %v45 = vld [vmem:[%s44] sm:$0x1]
    %46 = vrot.lane.b32.xlu0 %v45, 90
    %v47 = vpop.permute.xlu0 %46
    %vm48 = vcmask 818896
    %49 = vst.msk [vmem:[#allocation0] sm:$0x1] %vm48, %v47
    %s50 = scalar_lea.vmem %s0, 21
    %v51 = vld [vmem:[%s50] sm:$0x1]
    %52 = vrot.lane.b32.xlu0 %v51, 82
    %v53 = vpop.permute.xlu0 %52
    %vm54 = vcmask 753296
    %s55 = scalar_lea.vmem [#allocation0], 8
    %56 = vst.msk [vmem:[%s55] sm:$0x1] %vm54, %v53
    %s57 = scalar_lea.vmem %s0, 8
    %v58 = vld [vmem:[%s57] sm:$0x1]
    %59 = vrot.lane.b32.xlu0 %v58, 80
    %v60 = vpop.permute.xlu0 %59
    %vm61 = vcmask 736896
    %62 = vst.msk [vmem:[#allocation0] sm:$0x1] %vm61, %v60
    %s63 = scalar_lea.vmem %s0, 20
    %v64 = vld [vmem:[%s63] sm:$0x1]
    %65 = vrot.lane.b32.xlu0 %v64, 72
    %v66 = vpop.permute.xlu0 %65
    %vm67 = vcmask 671296
    %s68 = scalar_lea.vmem [#allocation0], 8
    %69 = vst.msk [vmem:[%s68] sm:$0x1] %vm67, %v66
    %s70 = scalar_lea.vmem %s0, 7
    %v71 = vld [vmem:[%s70] sm:$0x1]
    %72 = vrot.lane.b32.xlu0 %v71, 70
    %v73 = vpop.permute.xlu0 %72
    %vm74 = vcmask 654896
    %75 = vst.msk [vmem:[#allocation0] sm:$0x1] %vm74, %v73
    %s76 = scalar_lea.vmem %s0, 19
    %v77 = vld [vmem:[%s76] sm:$0x1]
    %78 = vrot.lane.b32.xlu0 %v77, 62
    %v79 = vpop.permute.xlu0 %78
    %vm80 = vcmask 589296
    %s81 = scalar_lea.vmem [#allocation0], 8
    %82 = vst.msk [vmem:[%s81] sm:$0x1] %vm80, %v79
    %s83 = scalar_lea.vmem %s0, 6
    %v84 = vld [vmem:[%s83] sm:$0x1]
    %85 = vrot.lane.b32.xlu0 %v84, 60
    %v86 = vpop.permute.xlu0 %85
    %vm87 = vcmask 572896
    %88 = vst.msk [vmem:[#allocation0] sm:$0x1] %vm87, %v86
    %s89 = scalar_lea.vmem %s0, 18
    %v90 = vld [vmem:[%s89] sm:$0x1]
    %91 = vrot.lane.b32.xlu0 %v90, 52
    %v92 = vpop.permute.xlu0 %91
    %vm93 = vcmask 507296
    %s94 = scalar_lea.vmem [#allocation0], 8
    %95 = vst.msk [vmem:[%s94] sm:$0x1] %vm93, %v92
    %s96 = scalar_lea.vmem %s0, 5
    %v97 = vld [vmem:[%s96] sm:$0x1]
    %98 = vrot.lane.b32.xlu0 %v97, 50
    %v99 = vpop.permute.xlu0 %98
    %vm100 = vcmask 490896
    %101 = vst.msk [vmem:[#allocation0] sm:$0x1] %vm100, %v99
    %s102 = scalar_lea.vmem %s0, 17
    %v103 = vld [vmem:[%s102] sm:$0x1]
    %104 = vrot.lane.b32.xlu0 %v103, 42
    %v105 = vpop.permute.xlu0 %104
    %vm106 = vcmask 425296
    %s107 = scalar_lea.vmem [#allocation0], 8
    %108 = vst.msk [vmem:[%s107] sm:$0x1] %vm106, %v105
    %s109 = scalar_lea.vmem %s0, 4
    %v110 = vld [vmem:[%s109] sm:$0x1]
    %111 = vrot.lane.b32.xlu0 %v110, 40
    %v112 = vpop.permute.xlu0 %111
    %vm113 = vcmask 408896
    %114 = vst.msk [vmem:[#allocation0] sm:$0x1] %vm113, %v112
    %s115 = scalar_lea.vmem %s0, 16
    %v116 = vld [vmem:[%s115] sm:$0x1]
    %117 = vrot.lane.b32.xlu0 %v116, 32
    %v118 = vpop.permute.xlu0 %117
    %vm119 = vcmask 343296
    %s120 = scalar_lea.vmem [#allocation0], 8
    %121 = vst.msk [vmem:[%s120] sm:$0x1] %vm119, %v118
    %s122 = scalar_lea.vmem %s0, 3
    %v123 = vld [vmem:[%s122] sm:$0x1]
    %124 = vrot.lane.b32.xlu0 %v123, 30
    %v125 = vpop.permute.xlu0 %124
    %vm126 = vcmask 326896
    %127 = vst.msk [vmem:[#allocation0] sm:$0x1] %vm126, %v125
    %s128 = scalar_lea.vmem %s0, 15
    %v129 = vld [vmem:[%s128] sm:$0x1]
    %130 = vrot.lane.b32.xlu0 %v129, 22
    %v131 = vpop.permute.xlu0 %130
    %vm132 = vcmask 261296
    %s133 = scalar_lea.vmem [#allocation0], 8
    %134 = vst.msk [vmem:[%s133] sm:$0x1] %vm132, %v131
    %s135 = scalar_lea.vmem %s0, 2
    %v136 = vld [vmem:[%s135] sm:$0x1]
    %137 = vrot.lane.b32.xlu0 %v136, 20
    %v138 = vpop.permute.xlu0 %137
    %vm139 = vcmask 244896
    %140 = vst.msk [vmem:[#allocation0] sm:$0x1] %vm139, %v138
    %s141 = scalar_lea.vmem %s0, 14
    %v142 = vld [vmem:[%s141] sm:$0x1]
    %143 = vrot.lane.b32.xlu0 %v142, 12
    %v144 = vpop.permute.xlu0 %143
    %vm145 = vcmask 179296
    %s146 = scalar_lea.vmem [#allocation0], 8
    %147 = vst.msk [vmem:[%s146] sm:$0x1] %vm145, %v144
    %s148 = scalar_lea.vmem %s0, 1
    %v149 = vld [vmem:[%s148] sm:$0x1]
    %150 = vrot.lane.b32.xlu0 %v149, 10
    %v151 = vpop.permute.xlu0 %150
    %vm152 = vcmask 162896
    %153 = vst.msk [vmem:[#allocation0] sm:$0x1] %vm152, %v151
    %s154 = scalar_lea.vmem %s0, 13
    %v155 = vld [vmem:[%s154] sm:$0x1]
    %156 = vrot.lane.b32.xlu0 %v155, 2
    %v157 = vpop.permute.xlu0 %156
    %vm158 = vcmask 97296
    %s159 = scalar_lea.vmem [#allocation0], 8
    %160 = vst.msk [vmem:[%s159] sm:$0x1] %vm158, %v157
    %s162 = ssub.s32 2, 1
    %v163 = vld [vmem:[#allocation0] sm:%s162]
    %s165 = ssub.s32 2, 1
    %166 = vst [vmem:[%s1] sm:%s165] %v163
    %s167 = scalar_lea.vmem [#allocation0], 8
    %v168 = vld [vmem:[%s167] sm:%s162]
    %s170 = ssub.s32 2, 1
    %s171 = scalar_lea.vmem %s1, 1
    %172 = vst [vmem:[%s171] sm:%s170] %v168

// kernel: tile.18
$region0: #{tile.18}
  #allocation0 [shape = 's32[1]{0}', space=sflag, size = 0x4, scoped, tag = 'scoped memory for tile.18']
  %s0 = inlined_call_operand.vmem [shape: f32[20], index: 0, kind: input, shape index: {}]
  %s1 = inlined_call_operand.vmem [shape: f32[8,20], index: 1, kind: output, shape index: {}]
  // Predicated region
  $region2: #{tile.18} parent=0 // pred_check
    _
  $region3: #{tile.18} parent=0 // pred_check_branch
    %3 = sbr.rel (0) target = $region5
  $region4: #{tile.18} parent=0 // pred_region
    _
  $region5: #{tile.18} parent=0 // pred_fallthru
    _
  %v4 = vld [vmem:[%s0] ss:$0 sm:$0xff]
  %5 = vst [vmem:[%s1] sm:$0xff] %v4

// kernel: tile.19
$region0: #{tile.19}
  %s0 = inlined_call_operand.vmem [shape: f32[8,20], index: 0, kind: input, shape index: {}]
  %s1 = inlined_call_operand.vmem [shape: f32[1,160], index: 1, kind: output, shape index: {}]
  $region1: #{tile.19} parent=0
    #allocation0 [shape = 'u8[8192]{0}', space=vmem, size = 0x2000, scoped, tag = 'scoped mem for output reshape']
    %v2 = vld [vmem:[%s0] sm:$0x1]
    %vm3 = vcmask 162816
    %4 = vst.msk [vmem:[#allocation0] sm:$0x1] %vm3, %v2
    %s5 = scalar_lea.vmem %s0, 6
    %v6 = vld [vmem:[%s5] sm:$0x1]
    %s7 = scalar_lea.vmem %s0, 6
    %v8 = vld [vmem:[%s7] sm:$0x1]
    %vm9 = vcmask 64512
    %v10 = vsel %vm9, %v8, %v6
    %11 = vrot.lane.b32.xlu0 %v10, 120
    %v12 = vpop.permute.xlu0 %11
    %vm13 = vcmask 97280
    %s14 = scalar_lea.vmem [#allocation0], 8
    %15 = vst.msk [vmem:[%s14] sm:$0x1] %vm13, %v12
    %vm16 = vcmask 1048512
    %17 = vst.msk [vmem:[#allocation0] sm:$0x1] %vm16, %v12
    %s18 = scalar_lea.vmem %s0, 5
    %v19 = vld [vmem:[%s18] sm:$0x1]
    %20 = vrot.lane.b32.xlu0 %v19, 100
    %v21 = vpop.permute.xlu0 %20
    %vm22 = vcmask 982816
    %23 = vst.msk [vmem:[#allocation0] sm:$0x1] %vm22, %v21
    %s24 = scalar_lea.vmem %s0, 4
    %v25 = vld [vmem:[%s24] sm:$0x1]
    %26 = vrot.lane.b32.xlu0 %v25, 80
    %v27 = vpop.permute.xlu0 %26
    %vm28 = vcmask 818816
    %29 = vst.msk [vmem:[#allocation0] sm:$0x1] %vm28, %v27
    %s30 = scalar_lea.vmem %s0, 3
    %v31 = vld [vmem:[%s30] sm:$0x1]
    %32 = vrot.lane.b32.xlu0 %v31, 60
    %v33 = vpop.permute.xlu0 %32
    %vm34 = vcmask 654816
    %35 = vst.msk [vmem:[#allocation0] sm:$0x1] %vm34, %v33
    %s36 = scalar_lea.vmem %s0, 2
    %v37 = vld [vmem:[%s36] sm:$0x1]
    %38 = vrot.lane.b32.xlu0 %v37, 40
    %v39 = vpop.permute.xlu0 %38
    %vm40 = vcmask 490816
    %41 = vst.msk [vmem:[#allocation0] sm:$0x1] %vm40, %v39
    %s42 = scalar_lea.vmem %s0, 1
    %v43 = vld [vmem:[%s42] sm:$0x1]
    %44 = vrot.lane.b32.xlu0 %v43, 20
    %v45 = vpop.permute.xlu0 %44
    %vm46 = vcmask 326816
    %47 = vst.msk [vmem:[#allocation0] sm:$0x1] %vm46, %v45
    %s48 = scalar_lea.vmem %s0, 7
    %v49 = vld [vmem:[%s48] sm:$0x1]
    %50 = vrot.lane.b32.xlu0 %v49, 12
    %v51 = vpop.permute.xlu0 %50
    %vm52 = vcmask 261216
    %s53 = scalar_lea.vmem [#allocation0], 8
    %54 = vst.msk [vmem:[%s53] sm:$0x1] %vm52, %v51
    %s56 = ssub.s32 2, 1
    %v57 = vld [vmem:[#allocation0] sm:%s56]
    %s59 = ssub.s32 2, 1
    %60 = vst [vmem:[%s1] sm:%s59] %v57
    %s61 = scalar_lea.vmem [#allocation0], 8
    %v62 = vld [vmem:[%s61] sm:%s56]
    %s64 = ssub.s32 2, 1
    %s65 = scalar_lea.vmem %s1, 1
    %66 = vst [vmem:[%s65] sm:%s64] %v62

// kernel: net_forward.1
$region0: #{net_forward.1}
  #allocation0 [shape = 'u32[]', space=smem, size = 0x4, offset = 0x4, fixed_abs, tag = 'smem constant byte address 0x4 - core index']
  #allocation1 [shape = 'u32[72,128]{1,0:T(1,128)}', space=vmem, size = 0x9000, scoped, tag = 'internal scratch']
  %s0 = inlined_call_operand.vmem [shape: f32[1,192,140], index: 0, kind: input, shape index: {}]
  %s1 = inlined_call_operand.vmem [shape: f32[140,240], index: 1, kind: input, shape index: {}]
  %s2 = inlined_call_operand.vmem [shape: f32[1,240], index: 2, kind: input, shape index: {}]
  %s3 = inlined_call_operand.vmem [shape: f32[5,120,160], index: 3, kind: input, shape index: {}]
  %s4 = inlined_call_operand.vmem [shape: f32[1,160], index: 4, kind: input, shape index: {}]
  %s5 = inlined_call_operand.vmem [shape: f32[2,240,120], index: 5, kind: input, shape index: {}]
  %s6 = inlined_call_operand.vmem [shape: f32[2,160,80], index: 6, kind: input, shape index: {}]
  %s7 = inlined_call_operand.vmem [shape: f32[4,80,50], index: 7, kind: input, shape index: {}]
  %s8 = inlined_call_operand.vmem [shape: f32[1,50], index: 8, kind: input, shape index: {}]
  %s9 = inlined_call_operand.vmem [shape: f32[50,128], index: 9, kind: input, shape index: {}]
  %s10 = inlined_call_operand.vmem [shape: f32[1,128], index: 10, kind: input, shape index: {}]
  %s11 = inlined_call_operand.vmem [shape: f32[8,128], index: 11, kind: output, shape index: {}]
  %s12 = sld [smem:[#allocation0]]
  $region54: #{net_forward.1} parent=0
    _
  %s14 = ssub.s32 1, %s12
  %s15 = scalar_select 0, %s14, %s12
  // Predicated region
  $region2: #{net_forward.1} parent=0 // pred_check
    _
  $region3: #{net_forward.1} parent=0 // pred_check_branch
    %17 = sbr.rel (0) target = $region5
  $region4: #{net_forward.1} parent=0 // pred_region
    _
  $region5: #{net_forward.1} parent=0 // pred_fallthru
    _
  // Predicated region
  $region6: #{net_forward.1} parent=0 // pred_check
    _
  $region7: #{net_forward.1} parent=0 // pred_check_branch
    %19 = sbr.rel (0) target = $region9
  $region8: #{net_forward.1} parent=0 // pred_region
    _
  $region9: #{net_forward.1} parent=0 // pred_fallthru
    _
  // Predicated region
  $region10: #{net_forward.1} parent=0 // pred_check
    _
  $region11: #{net_forward.1} parent=0 // pred_check_branch
    %21 = sbr.rel (0) target = $region13
  $region12: #{net_forward.1} parent=0 // pred_region
    _
  $region13: #{net_forward.1} parent=0 // pred_fallthru
    _
  // Predicated region
  $region14: #{net_forward.1} parent=0 // pred_check
    _
  $region15: #{net_forward.1} parent=0 // pred_check_branch
    %23 = sbr.rel (0) target = $region17
  $region16: #{net_forward.1} parent=0 // pred_region
    _
  $region17: #{net_forward.1} parent=0 // pred_fallthru
    _
  // Predicated region
  $region18: #{net_forward.1} parent=0 // pred_check
    _
  $region19: #{net_forward.1} parent=0 // pred_check_branch
    %25 = sbr.rel (0) target = $region21
  $region20: #{net_forward.1} parent=0 // pred_region
    _
  $region21: #{net_forward.1} parent=0 // pred_fallthru
    _
  // Predicated region
  $region22: #{net_forward.1} parent=0 // pred_check
    _
  $region23: #{net_forward.1} parent=0 // pred_check_branch
    %27 = sbr.rel (0) target = $region25
  $region24: #{net_forward.1} parent=0 // pred_region
    _
  $region25: #{net_forward.1} parent=0 // pred_fallthru
    _
  // Predicated region
  $region26: #{net_forward.1} parent=0 // pred_check
    _
  $region27: #{net_forward.1} parent=0 // pred_check_branch
    %29 = sbr.rel (0) target = $region29
  $region28: #{net_forward.1} parent=0 // pred_region
    _
  $region29: #{net_forward.1} parent=0 // pred_fallthru
    _
  // Predicated region
  $region30: #{net_forward.1} parent=0 // pred_check
    _
  $region31: #{net_forward.1} parent=0 // pred_check_branch
    %31 = sbr.rel (0) target = $region33
  $region32: #{net_forward.1} parent=0 // pred_region
    _
  $region33: #{net_forward.1} parent=0 // pred_fallthru
    _
  // Predicated region
  $region34: #{net_forward.1} parent=0 // pred_check
    _
  $region35: #{net_forward.1} parent=0 // pred_check_branch
    %33 = sbr.rel (0) target = $region37
  $region36: #{net_forward.1} parent=0 // pred_region
    _
  $region37: #{net_forward.1} parent=0 // pred_fallthru
    _
  // Predicated region
  $region38: #{net_forward.1} parent=0 // pred_check
    _
  $region39: #{net_forward.1} parent=0 // pred_check_branch
    %35 = sbr.rel (0) target = $region41
  $region40: #{net_forward.1} parent=0 // pred_region
    _
  $region41: #{net_forward.1} parent=0 // pred_fallthru
    _
  // Predicated region
  $region42: #{net_forward.1} parent=0 // pred_check
    _
  $region43: #{net_forward.1} parent=0 // pred_check_branch
    %37 = sbr.rel (0) target = $region45
  $region44: #{net_forward.1} parent=0 // pred_region
    _
  $region45: #{net_forward.1} parent=0 // pred_fallthru
    _
  %v38 = vld [vmem:[%s0] sm:$0xff]
  %v39 = vld [vmem:[%s0 + $0x8] sm:$0xff]
  %v40 = vld [vmem:[%s0 + $0x10] sm:$0xff]
  %v41 = vld [vmem:[%s0 + $0x18] sm:$0xff]
  %v42 = vld [vmem:[%s0 + $0x20] sm:$0xff]
  %v43 = vld [vmem:[%s0 + $0x28] sm:$0xff]
  %v44 = vld [vmem:[%s0 + $0x30] sm:$0xff]
  %v45 = vld [vmem:[%s0 + $0x38] sm:$0xff]
  %v46 = vld [vmem:[%s0 + $0x40] sm:$0xff]
  %v47 = vld [vmem:[%s0 + $0x48] sm:$0xff]
  %v48 = vld [vmem:[%s0 + $0x50] sm:$0xff]
  %v49 = vld [vmem:[%s0 + $0x58] sm:$0xff]
  %v50 = vld [vmem:[%s0 + $0x60] sm:$0xff]
  %v51 = vld [vmem:[%s0 + $0x68] sm:$0xff]
  %v52 = vld [vmem:[%s0 + $0x70] sm:$0xff]
  %v53 = vld [vmem:[%s0 + $0x78] sm:$0xff]
  %v54 = vld [vmem:[%s0 + $0x80] sm:$0xff]
  %v55 = vld [vmem:[%s0 + $0x88] sm:$0xff]
  %v56 = vld [vmem:[%s0 + $0x90] sm:$0xff]
  %v57 = vld [vmem:[%s0 + $0x98] sm:$0xff]
  %v58 = vld [vmem:[%s0 + $0xa0] sm:$0xff]
  %v59 = vld [vmem:[%s0 + $0xa8] sm:$0xff]
  %v60 = vld [vmem:[%s0 + $0xb0] sm:$0xff]
  %v61 = vld [vmem:[%s0 + $0xb8] sm:$0xff]
  %v62 = vld [vmem:[%s0 + $0xc0] sm:$0xff]
  %v63 = vld [vmem:[%s0 + $0xc8] sm:$0xff]
  %v64 = vld [vmem:[%s0 + $0xd0] sm:$0xff]
  %v65 = vld [vmem:[%s0 + $0xd8] sm:$0xff]
  %v66 = vld [vmem:[%s0 + $0xe0] sm:$0xff]
  %v67 = vld [vmem:[%s0 + $0xe8] sm:$0xff]
  %v68 = vld [vmem:[%s0 + $0xf0] sm:$0xff]
  %v69 = vld [vmem:[%s0 + $0xf8] sm:$0xff]
  %v70 = vld [vmem:[%s0 + $0x100] sm:$0xff]
  %v71 = vld [vmem:[%s0 + $0x108] sm:$0xff]
  %v72 = vld [vmem:[%s0 + $0x110] sm:$0xff]
  %v73 = vld [vmem:[%s0 + $0x118] sm:$0xff]
  %v74 = vld [vmem:[%s0 + $0x120] sm:$0xff]
  %v75 = vld [vmem:[%s0 + $0x128] sm:$0xff]
  %v76 = vld [vmem:[%s0 + $0x130] sm:$0xff]
  %v77 = vld [vmem:[%s0 + $0x138] sm:$0xff]
  %v78 = vld [vmem:[%s0 + $0x140] sm:$0xff]
  %v79 = vld [vmem:[%s0 + $0x148] sm:$0xff]
  %v80 = vld [vmem:[%s0 + $0x150] sm:$0xff]
  %v81 = vld [vmem:[%s0 + $0x158] sm:$0xff]
  %v82 = vld [vmem:[%s0 + $0x160] sm:$0xff]
  %v83 = vld [vmem:[%s0 + $0x168] sm:$0xff]
  %v84 = vld [vmem:[%s0 + $0x170] sm:$0xff]
  %v85 = vld [vmem:[%s0 + $0x178] sm:$0xff]
  %v86 = vld [vmem:[%s1] sm:$0xff]
  %v87 = vld [vmem:[%s1 + $0x8] sm:$0xff]
  %v88 = vld [vmem:[%s1 + $0x10] sm:$0xff]
  %v89 = vld [vmem:[%s1 + $0x18] sm:$0xff]
  %v90 = vld [vmem:[%s1 + $0x20] sm:$0xff]
  %v91 = vld [vmem:[%s1 + $0x28] sm:$0xff]
  %v92 = vld [vmem:[%s1 + $0x30] sm:$0xff]
  %v93 = vld [vmem:[%s1 + $0x38] sm:$0xff]
  %v94 = vld [vmem:[%s1 + $0x40] sm:$0xff]
  %v95 = vld [vmem:[%s1 + $0x48] sm:$0xff]
  %v96 = vld [vmem:[%s1 + $0x50] sm:$0xff]
  %v97 = vld [vmem:[%s1 + $0x58] sm:$0xff]
  %v98 = vld [vmem:[%s1 + $0x60] sm:$0xff]
  %v99 = vld [vmem:[%s1 + $0x68] sm:$0xff]
  %v100 = vld [vmem:[%s1 + $0x70] sm:$0xff]
  %v101 = vld [vmem:[%s1 + $0x78] sm:$0xff]
  %v102 = vld [vmem:[%s1 + $0x80] sm:$0xff]
  %v103 = vld [vmem:[%s1 + $0x88] sm:$0xff]
  %v104 = vld [vmem:[%s1 + $0x90] sm:$0xff]
  %v105 = vld [vmem:[%s1 + $0x98] sm:$0xff]
  %v106 = vld [vmem:[%s1 + $0xa0] sm:$0xff]
  %v107 = vld [vmem:[%s1 + $0xa8] sm:$0xff]
  %v108 = vld [vmem:[%s1 + $0xb0] sm:$0xff]
  %v109 = vld [vmem:[%s1 + $0xb8] sm:$0xff]
  %v110 = vld [vmem:[%s1 + $0xc0] sm:$0xff]
  %v111 = vld [vmem:[%s1 + $0xc8] sm:$0xff]
  %v112 = vld [vmem:[%s1 + $0xd0] sm:$0xff]
  %v113 = vld [vmem:[%s1 + $0xd8] sm:$0xff]
  %v114 = vld [vmem:[%s1 + $0xe0] sm:$0xff]
  %v115 = vld [vmem:[%s1 + $0xe8] sm:$0xff]
  %v116 = vld [vmem:[%s1 + $0xf0] sm:$0xff]
  %v117 = vld [vmem:[%s1 + $0xf8] sm:$0xff]
  %v118 = vld [vmem:[%s1 + $0x100] sm:$0xff]
  %v119 = vld [vmem:[%s1 + $0x108] sm:$0xff]
  %v120 = vld [vmem:[%s1 + $0x110] sm:$0xf]
  %v121 = vld [vmem:[%s1 + $0x118] sm:$0xf]
  %v122 = vld [vmem:[%s2] sm:$0x3]
  %v124 = vperm.slane %v122, 0
  %v125 = vperm.slane %v122, 1
  %vm128 = vcmask 97280
  %v130 = vsel %vm128, %v39, 0
  %v133 = vsel %vm128, %v41, 0
  %v136 = vsel %vm128, %v43, 0
  %v139 = vsel %vm128, %v45, 0
  %v142 = vsel %vm128, %v47, 0
  %v145 = vsel %vm128, %v49, 0
  %v148 = vsel %vm128, %v51, 0
  %v151 = vsel %vm128, %v53, 0
  %v154 = vsel %vm128, %v55, 0
  %v157 = vsel %vm128, %v57, 0
  %v160 = vsel %vm128, %v59, 0
  %v163 = vsel %vm128, %v61, 0
  %v166 = vsel %vm128, %v63, 0
  %v169 = vsel %vm128, %v65, 0
  %v172 = vsel %vm128, %v67, 0
  %v175 = vsel %vm128, %v69, 0
  %v178 = vsel %vm128, %v71, 0
  %v181 = vsel %vm128, %v73, 0
  %v184 = vsel %vm128, %v75, 0
  %v187 = vsel %vm128, %v77, 0
  %v190 = vsel %vm128, %v79, 0
  %v193 = vsel %vm128, %v81, 0
  %v196 = vsel %vm128, %v83, 0
  %v199 = vsel %vm128, %v85, 0
  %vm201 = vcmask 1043456
  %v203 = vsel %vm201, %v120, 0
  %v206 = vsel %vm201, %v121, 0
  %208 = vmatpush.msra.mxu0 %v116
  %209 = vmatpush.msra.mxu0 %v114
  %210 = vmatpush.msra.mxu0 %v112
  %211 = vmatpush.msra.mxu0 %v110
  %212 = vmatpush.msra.mxu0 %v108
  %213 = vmatpush.msra.mxu0 %v106
  %214 = vmatpush.msra.mxu0 %v104
  %215 = vmatpush.msra.mxu0 %v102
  %216 = vmatpush.msra.mxu0 %v100
  %217 = vmatpush.msra.mxu0 %v98
  %218 = vmatpush.msra.mxu0 %v96
  %219 = vmatpush.msra.mxu0 %v94
  %220 = vmatpush.msra.mxu0 %v92
  %221 = vmatpush.msra.mxu0 %v90
  %222 = vmatpush.msra.mxu0 %v88
  %223 = vmatpush.msra.mxu0 %v86
  %224 = vmatmul.f32.gmra.mxu0 %v38
  %v225 = vpop.f32.mrf.mxu0
  %v226 = vadd.f32 %v124, %v225
  %227 = vmatmul.f32.gmra.mxu0 %v40
  %v228 = vpop.f32.mrf.mxu0
  %v229 = vadd.f32 %v124, %v228
  %230 = vmatmul.f32.gmra.mxu0 %v42
  %v231 = vpop.f32.mrf.mxu0
  %v232 = vadd.f32 %v124, %v231
  %233 = vmatmul.f32.gmra.mxu0 %v44
  %v234 = vpop.f32.mrf.mxu0
  %v235 = vadd.f32 %v124, %v234
  %236 = vmatmul.f32.gmra.mxu0 %v46
  %v237 = vpop.f32.mrf.mxu0
  %v238 = vadd.f32 %v124, %v237
  %239 = vmatmul.f32.gmra.mxu0 %v48
  %v240 = vpop.f32.mrf.mxu0
  %v241 = vadd.f32 %v124, %v240
  %242 = vmatmul.f32.gmra.mxu0 %v50
  %v243 = vpop.f32.mrf.mxu0
  %v244 = vadd.f32 %v124, %v243
  %245 = vmatmul.f32.gmra.mxu0 %v52
  %v246 = vpop.f32.mrf.mxu0
  %v247 = vadd.f32 %v124, %v246
  %248 = vmatmul.f32.gmra.mxu0 %v54
  %v249 = vpop.f32.mrf.mxu0
  %v250 = vadd.f32 %v124, %v249
  %251 = vmatmul.f32.gmra.mxu0 %v56
  %v252 = vpop.f32.mrf.mxu0
  %v253 = vadd.f32 %v124, %v252
  %254 = vmatmul.f32.gmra.mxu0 %v58
  %v255 = vpop.f32.mrf.mxu0
  %v256 = vadd.f32 %v124, %v255
  %257 = vmatmul.f32.gmra.mxu0 %v60
  %v258 = vpop.f32.mrf.mxu0
  %v259 = vadd.f32 %v124, %v258
  %260 = vmatmul.f32.gmra.mxu0 %v62
  %v261 = vpop.f32.mrf.mxu0
  %v262 = vadd.f32 %v124, %v261
  %263 = vmatmul.f32.gmra.mxu0 %v64
  %v264 = vpop.f32.mrf.mxu0
  %v265 = vadd.f32 %v124, %v264
  %266 = vmatmul.f32.gmra.mxu0 %v66
  %v267 = vpop.f32.mrf.mxu0
  %v268 = vadd.f32 %v124, %v267
  %269 = vmatmul.f32.gmra.mxu0 %v68
  %v270 = vpop.f32.mrf.mxu0
  %v271 = vadd.f32 %v124, %v270
  %272 = vmatmul.f32.gmra.mxu0 %v70
  %v273 = vpop.f32.mrf.mxu0
  %v274 = vadd.f32 %v124, %v273
  %275 = vmatmul.f32.gmra.mxu0 %v72
  %v276 = vpop.f32.mrf.mxu0
  %v277 = vadd.f32 %v124, %v276
  %278 = vmatmul.f32.gmra.mxu0 %v74
  %v279 = vpop.f32.mrf.mxu0
  %v280 = vadd.f32 %v124, %v279
  %281 = vmatmul.f32.gmra.mxu0 %v76
  %v282 = vpop.f32.mrf.mxu0
  %v283 = vadd.f32 %v124, %v282
  %284 = vmatmul.f32.gmra.mxu0 %v78
  %v285 = vpop.f32.mrf.mxu0
  %v286 = vadd.f32 %v124, %v285
  %287 = vmatmul.f32.gmra.mxu0 %v80
  %v288 = vpop.f32.mrf.mxu0
  %v289 = vadd.f32 %v124, %v288
  %290 = vmatmul.f32.gmra.mxu0 %v82
  %v291 = vpop.f32.mrf.mxu0
  %v292 = vadd.f32 %v124, %v291
  %293 = vmatmul.f32.gmra.mxu0 %v84
  %v294 = vpop.f32.mrf.mxu0
  %v295 = vadd.f32 %v124, %v294
  %296 = vdwg.mxu0
  %297 = vmatpush.msra.mxu0 0.0
  %298 = vmatpush.msra.mxu0 0.0
  %299 = vmatpush.msra.mxu0 0.0
  %300 = vmatpush.msra.mxu0 0.0
  %301 = vmatpush.msra.mxu0 0.0
  %302 = vmatpush.msra.mxu0 0.0
  %303 = vmatpush.msra.mxu0 0.0
  %304 = vmatpush.msra.mxu0 0.0
  %305 = vmatpush.msra.mxu0 0.0
  %306 = vmatpush.msra.mxu0 0.0
  %307 = vmatpush.msra.mxu0 0.0
  %308 = vmatpush.msra.mxu0 0.0
  %309 = vmatpush.msra.mxu0 0.0
  %310 = vmatpush.msra.mxu0 0.0
  %311 = vmatpush.msra.mxu0 %v203
  %312 = vmatpush.msra.mxu0 %v118
  %313 = vmatmul.f32.gmra.mxu0 %v130
  %v314 = vpop.f32.mrf.mxu0
  %v315 = vadd.f32 %v226, %v314
  %316 = vmatmul.f32.gmra.mxu0 %v133
  %v317 = vpop.f32.mrf.mxu0
  %v318 = vadd.f32 %v229, %v317
  %319 = vmatmul.f32.gmra.mxu0 %v136
  %v320 = vpop.f32.mrf.mxu0
  %v321 = vadd.f32 %v232, %v320
  %322 = vmatmul.f32.gmra.mxu0 %v139
  %v323 = vpop.f32.mrf.mxu0
  %v324 = vadd.f32 %v235, %v323
  %325 = vmatmul.f32.gmra.mxu0 %v142
  %v326 = vpop.f32.mrf.mxu0
  %v327 = vadd.f32 %v238, %v326
  %328 = vmatmul.f32.gmra.mxu0 %v145
  %v329 = vpop.f32.mrf.mxu0
  %v330 = vadd.f32 %v241, %v329
  %331 = vmatmul.f32.gmra.mxu0 %v148
  %v332 = vpop.f32.mrf.mxu0
  %v333 = vadd.f32 %v244, %v332
  %334 = vmatmul.f32.gmra.mxu0 %v151
  %v335 = vpop.f32.mrf.mxu0
  %v336 = vadd.f32 %v247, %v335
  %337 = vmatmul.f32.gmra.mxu0 %v154
  %v338 = vpop.f32.mrf.mxu0
  %v339 = vadd.f32 %v250, %v338
  %340 = vmatmul.f32.gmra.mxu0 %v157
  %v341 = vpop.f32.mrf.mxu0
  %v342 = vadd.f32 %v253, %v341
  %343 = vmatmul.f32.gmra.mxu0 %v160
  %v344 = vpop.f32.mrf.mxu0
  %v345 = vadd.f32 %v256, %v344
  %346 = vmatmul.f32.gmra.mxu0 %v163
  %v347 = vpop.f32.mrf.mxu0
  %v348 = vadd.f32 %v259, %v347
  %349 = vmatmul.f32.gmra.mxu0 %v166
  %v350 = vpop.f32.mrf.mxu0
  %v351 = vadd.f32 %v262, %v350
  %352 = vmatmul.f32.gmra.mxu0 %v169
  %v353 = vpop.f32.mrf.mxu0
  %v354 = vadd.f32 %v265, %v353
  %355 = vmatmul.f32.gmra.mxu0 %v172
  %v356 = vpop.f32.mrf.mxu0
  %v357 = vadd.f32 %v268, %v356
  %358 = vmatmul.f32.gmra.mxu0 %v175
  %v359 = vpop.f32.mrf.mxu0
  %v360 = vadd.f32 %v271, %v359
  %361 = vmatmul.f32.gmra.mxu0 %v178
  %v362 = vpop.f32.mrf.mxu0
  %v363 = vadd.f32 %v274, %v362
  %364 = vmatmul.f32.gmra.mxu0 %v181
  %v365 = vpop.f32.mrf.mxu0
  %v366 = vadd.f32 %v277, %v365
  %367 = vmatmul.f32.gmra.mxu0 %v184
  %v368 = vpop.f32.mrf.mxu0
  %v369 = vadd.f32 %v280, %v368
  %370 = vmatmul.f32.gmra.mxu0 %v187
  %v371 = vpop.f32.mrf.mxu0
  %v372 = vadd.f32 %v283, %v371
  %373 = vmatmul.f32.gmra.mxu0 %v190
  %v374 = vpop.f32.mrf.mxu0
  %v375 = vadd.f32 %v286, %v374
  %376 = vmatmul.f32.gmra.mxu0 %v193
  %v377 = vpop.f32.mrf.mxu0
  %v378 = vadd.f32 %v289, %v377
  %379 = vmatmul.f32.gmra.mxu0 %v196
  %v380 = vpop.f32.mrf.mxu0
  %v381 = vadd.f32 %v292, %v380
  %382 = vmatmul.f32.gmra.mxu0 %v199
  %v383 = vpop.f32.mrf.mxu0
  %v384 = vadd.f32 %v295, %v383
  %385 = vdwg.mxu0
  %386 = vmatpush.msra.mxu0 %v117
  %387 = vmatpush.msra.mxu0 %v115
  %388 = vmatpush.msra.mxu0 %v113
  %389 = vmatpush.msra.mxu0 %v111
  %390 = vmatpush.msra.mxu0 %v109
  %391 = vmatpush.msra.mxu0 %v107
  %392 = vmatpush.msra.mxu0 %v105
  %393 = vmatpush.msra.mxu0 %v103
  %394 = vmatpush.msra.mxu0 %v101
  %395 = vmatpush.msra.mxu0 %v99
  %396 = vmatpush.msra.mxu0 %v97
  %397 = vmatpush.msra.mxu0 %v95
  %398 = vmatpush.msra.mxu0 %v93
  %399 = vmatpush.msra.mxu0 %v91
  %400 = vmatpush.msra.mxu0 %v89
  %401 = vmatpush.msra.mxu0 %v87
  %402 = vmatmul.f32.gmra.mxu0 %v38
  %v403 = vpop.f32.mrf.mxu0
  %v404 = vadd.f32 %v125, %v403
  %405 = vmatmul.f32.gmra.mxu0 %v40
  %v406 = vpop.f32.mrf.mxu0
  %v407 = vadd.f32 %v125, %v406
  %408 = vmatmul.f32.gmra.mxu0 %v42
  %v409 = vpop.f32.mrf.mxu0
  %v410 = vadd.f32 %v125, %v409
  %411 = vmatmul.f32.gmra.mxu0 %v44
  %v412 = vpop.f32.mrf.mxu0
  %v413 = vadd.f32 %v125, %v412
  %414 = vmatmul.f32.gmra.mxu0 %v46
  %v415 = vpop.f32.mrf.mxu0
  %v416 = vadd.f32 %v125, %v415
  %417 = vmatmul.f32.gmra.mxu0 %v48
  %v418 = vpop.f32.mrf.mxu0
  %v419 = vadd.f32 %v125, %v418
  %420 = vmatmul.f32.gmra.mxu0 %v50
  %v421 = vpop.f32.mrf.mxu0
  %v422 = vadd.f32 %v125, %v421
  %423 = vmatmul.f32.gmra.mxu0 %v52
  %v424 = vpop.f32.mrf.mxu0
  %v425 = vadd.f32 %v125, %v424
  %426 = vmatmul.f32.gmra.mxu0 %v54
  %v427 = vpop.f32.mrf.mxu0
  %v428 = vadd.f32 %v125, %v427
  %429 = vmatmul.f32.gmra.mxu0 %v56
  %v430 = vpop.f32.mrf.mxu0
  %v431 = vadd.f32 %v125, %v430
  %432 = vmatmul.f32.gmra.mxu0 %v58
  %v433 = vpop.f32.mrf.mxu0
  %v434 = vadd.f32 %v125, %v433
  %435 = vmatmul.f32.gmra.mxu0 %v60
  %v436 = vpop.f32.mrf.mxu0
  %v437 = vadd.f32 %v125, %v436
  %438 = vmatmul.f32.gmra.mxu0 %v62
  %v439 = vpop.f32.mrf.mxu0
  %v440 = vadd.f32 %v125, %v439
  %441 = vmatmul.f32.gmra.mxu0 %v64
  %v442 = vpop.f32.mrf.mxu0
  %v443 = vadd.f32 %v125, %v442
  %444 = vmatmul.f32.gmra.mxu0 %v66
  %v445 = vpop.f32.mrf.mxu0
  %v446 = vadd.f32 %v125, %v445
  %447 = vmatmul.f32.gmra.mxu0 %v68
  %v448 = vpop.f32.mrf.mxu0
  %v449 = vadd.f32 %v125, %v448
  %450 = vmatmul.f32.gmra.mxu0 %v70
  %v451 = vpop.f32.mrf.mxu0
  %v452 = vadd.f32 %v125, %v451
  %453 = vmatmul.f32.gmra.mxu0 %v72
  %v454 = vpop.f32.mrf.mxu0
  %v455 = vadd.f32 %v125, %v454
  %456 = vmatmul.f32.gmra.mxu0 %v74
  %v457 = vpop.f32.mrf.mxu0
  %v458 = vadd.f32 %v125, %v457
  %459 = vmatmul.f32.gmra.mxu0 %v76
  %v460 = vpop.f32.mrf.mxu0
  %v461 = vadd.f32 %v125, %v460
  %462 = vmatmul.f32.gmra.mxu0 %v78
  %v463 = vpop.f32.mrf.mxu0
  %v464 = vadd.f32 %v125, %v463
  %465 = vmatmul.f32.gmra.mxu0 %v80
  %v466 = vpop.f32.mrf.mxu0
  %v467 = vadd.f32 %v125, %v466
  %468 = vmatmul.f32.gmra.mxu0 %v82
  %v469 = vpop.f32.mrf.mxu0
  %v470 = vadd.f32 %v125, %v469
  %471 = vmatmul.f32.gmra.mxu0 %v84
  %v472 = vpop.f32.mrf.mxu0
  %v473 = vadd.f32 %v125, %v472
  %474 = vdwg.mxu0
  %475 = vmatpush.msra.mxu0 0.0
  %476 = vmatpush.msra.mxu0 0.0
  %477 = vmatpush.msra.mxu0 0.0
  %478 = vmatpush.msra.mxu0 0.0
  %479 = vmatpush.msra.mxu0 0.0
  %480 = vmatpush.msra.mxu0 0.0
  %481 = vmatpush.msra.mxu0 0.0
  %482 = vmatpush.msra.mxu0 0.0
  %483 = vmatpush.msra.mxu0 0.0
  %484 = vmatpush.msra.mxu0 0.0
  %485 = vmatpush.msra.mxu0 0.0
  %486 = vmatpush.msra.mxu0 0.0
  %487 = vmatpush.msra.mxu0 0.0
  %488 = vmatpush.msra.mxu0 0.0
  %489 = vmatpush.msra.mxu0 %v206
  %490 = vmatpush.msra.mxu0 %v119
  %491 = vmatmul.f32.gmra.mxu0 %v130
  %v492 = vpop.f32.mrf.mxu0
  %v493 = vadd.f32 %v404, %v492
  %494 = vmatmul.f32.gmra.mxu0 %v133
  %v495 = vpop.f32.mrf.mxu0
  %v496 = vadd.f32 %v407, %v495
  %497 = vmatmul.f32.gmra.mxu0 %v136
  %v498 = vpop.f32.mrf.mxu0
  %v499 = vadd.f32 %v410, %v498
  %500 = vmatmul.f32.gmra.mxu0 %v139
  %v501 = vpop.f32.mrf.mxu0
  %v502 = vadd.f32 %v413, %v501
  %503 = vmatmul.f32.gmra.mxu0 %v142
  %v504 = vpop.f32.mrf.mxu0
  %v505 = vadd.f32 %v416, %v504
  %506 = vmatmul.f32.gmra.mxu0 %v145
  %v507 = vpop.f32.mrf.mxu0
  %v508 = vadd.f32 %v419, %v507
  %509 = vmatmul.f32.gmra.mxu0 %v148
  %v510 = vpop.f32.mrf.mxu0
  %v511 = vadd.f32 %v422, %v510
  %512 = vmatmul.f32.gmra.mxu0 %v151
  %v513 = vpop.f32.mrf.mxu0
  %v514 = vadd.f32 %v425, %v513
  %515 = vmatmul.f32.gmra.mxu0 %v154
  %v516 = vpop.f32.mrf.mxu0
  %v517 = vadd.f32 %v428, %v516
  %518 = vmatmul.f32.gmra.mxu0 %v157
  %v519 = vpop.f32.mrf.mxu0
  %v520 = vadd.f32 %v431, %v519
  %521 = vmatmul.f32.gmra.mxu0 %v160
  %v522 = vpop.f32.mrf.mxu0
  %v523 = vadd.f32 %v434, %v522
  %524 = vmatmul.f32.gmra.mxu0 %v163
  %v525 = vpop.f32.mrf.mxu0
  %v526 = vadd.f32 %v437, %v525
  %527 = vmatmul.f32.gmra.mxu0 %v166
  %v528 = vpop.f32.mrf.mxu0
  %v529 = vadd.f32 %v440, %v528
  %530 = vmatmul.f32.gmra.mxu0 %v169
  %v531 = vpop.f32.mrf.mxu0
  %v532 = vadd.f32 %v443, %v531
  %533 = vmatmul.f32.gmra.mxu0 %v172
  %v534 = vpop.f32.mrf.mxu0
  %v535 = vadd.f32 %v446, %v534
  %536 = vmatmul.f32.gmra.mxu0 %v175
  %v537 = vpop.f32.mrf.mxu0
  %v538 = vadd.f32 %v449, %v537
  %539 = vmatmul.f32.gmra.mxu0 %v178
  %v540 = vpop.f32.mrf.mxu0
  %v541 = vadd.f32 %v452, %v540
  %542 = vmatmul.f32.gmra.mxu0 %v181
  %v543 = vpop.f32.mrf.mxu0
  %v544 = vadd.f32 %v455, %v543
  %545 = vmatmul.f32.gmra.mxu0 %v184
  %v546 = vpop.f32.mrf.mxu0
  %v547 = vadd.f32 %v458, %v546
  %548 = vmatmul.f32.gmra.mxu0 %v187
  %v549 = vpop.f32.mrf.mxu0
  %v550 = vadd.f32 %v461, %v549
  %551 = vmatmul.f32.gmra.mxu0 %v190
  %v552 = vpop.f32.mrf.mxu0
  %v553 = vadd.f32 %v464, %v552
  %554 = vmatmul.f32.gmra.mxu0 %v193
  %v555 = vpop.f32.mrf.mxu0
  %v556 = vadd.f32 %v467, %v555
  %557 = vmatmul.f32.gmra.mxu0 %v196
  %v558 = vpop.f32.mrf.mxu0
  %v559 = vadd.f32 %v470, %v558
  %560 = vmatmul.f32.gmra.mxu0 %v199
  %v561 = vpop.f32.mrf.mxu0
  %v562 = vadd.f32 %v473, %v561
  %563 = vdwg.mxu0
  %v564 = vmax.f32 %v315, %v351
  %v565 = vmax.f32 %v493, %v529
  %v566 = vmax.f32 %v318, %v354
  %v567 = vmax.f32 %v496, %v532
  %v568 = vmax.f32 %v321, %v357
  %v569 = vmax.f32 %v499, %v535
  %v570 = vmax.f32 %v324, %v360
  %v571 = vmax.f32 %v502, %v538
  %v572 = vmax.f32 %v327, %v363
  %v573 = vmax.f32 %v505, %v541
  %v574 = vmax.f32 %v330, %v366
  %v575 = vmax.f32 %v508, %v544
  %v576 = vmax.f32 %v333, %v369
  %v577 = vmax.f32 %v511, %v547
  %v578 = vmax.f32 %v336, %v372
  %v579 = vmax.f32 %v514, %v550
  %v580 = vmax.f32 %v339, %v375
  %v581 = vmax.f32 %v517, %v553
  %v582 = vmax.f32 %v342, %v378
  %v583 = vmax.f32 %v520, %v556
  %v584 = vmax.f32 %v345, %v381
  %v585 = vmax.f32 %v523, %v559
  %v586 = vmax.f32 %v348, %v384
  %v587 = vmax.f32 %v526, %v562
  %v588 = vld [vmem:[%s5] sm:$0xff]
  %v589 = vld [vmem:[%s5 + $0x8] sm:$0xff]
  %v590 = vld [vmem:[%s5 + $0x10] sm:$0xff]
  %v591 = vld [vmem:[%s5 + $0x18] sm:$0xff]
  %v592 = vld [vmem:[%s5 + $0x20] sm:$0xff]
  %v593 = vld [vmem:[%s5 + $0x28] sm:$0xff]
  %v594 = vld [vmem:[%s5 + $0x30] sm:$0xff]
  %v595 = vld [vmem:[%s5 + $0x38] sm:$0xff]
  %v596 = vld [vmem:[%s5 + $0x40] sm:$0xff]
  %v597 = vld [vmem:[%s5 + $0x48] sm:$0xff]
  %v598 = vld [vmem:[%s5 + $0x50] sm:$0xff]
  %v599 = vld [vmem:[%s5 + $0x58] sm:$0xff]
  %v600 = vld [vmem:[%s5 + $0x60] sm:$0xff]
  %v601 = vld [vmem:[%s5 + $0x68] sm:$0xff]
  %v602 = vld [vmem:[%s5 + $0x70] sm:$0xff]
  %v603 = vld [vmem:[%s5 + $0x78] sm:$0xff]
  %v604 = vld [vmem:[%s5 + $0x80] sm:$0xff]
  %v605 = vld [vmem:[%s5 + $0x88] sm:$0xff]
  %v606 = vld [vmem:[%s5 + $0x90] sm:$0xff]
  %v607 = vld [vmem:[%s5 + $0x98] sm:$0xff]
  %v608 = vld [vmem:[%s5 + $0xa0] sm:$0xff]
  %v609 = vld [vmem:[%s5 + $0xa8] sm:$0xff]
  %v610 = vld [vmem:[%s5 + $0xb0] sm:$0xff]
  %v611 = vld [vmem:[%s5 + $0xb8] sm:$0xff]
  %v612 = vld [vmem:[%s5 + $0xc0] sm:$0xff]
  %v613 = vld [vmem:[%s5 + $0xc8] sm:$0xff]
  %v614 = vld [vmem:[%s5 + $0xd0] sm:$0xff]
  %v615 = vld [vmem:[%s5 + $0xd8] sm:$0xff]
  %v616 = vld [vmem:[%s5 + $0xe0] sm:$0xff]
  %v617 = vld [vmem:[%s5 + $0xe8] sm:$0xff]
  %vm618 = vcmask 916480
  %v620 = vsel %vm618, %v565, 0
  %v623 = vsel %vm618, %v567, 0
  %v626 = vsel %vm618, %v569, 0
  %v629 = vsel %vm618, %v571, 0
  %v632 = vsel %vm618, %v573, 0
  %v635 = vsel %vm618, %v575, 0
  %v638 = vsel %vm618, %v577, 0
  %v641 = vsel %vm618, %v579, 0
  %v644 = vsel %vm618, %v581, 0
  %v647 = vsel %vm618, %v583, 0
  %v650 = vsel %vm618, %v585, 0
  %v653 = vsel %vm618, %v587, 0
  %655 = vmatpush.msra.mxu0 %v603
  %656 = vmatpush.msra.mxu0 %v602
  %657 = vmatpush.msra.mxu0 %v601
  %658 = vmatpush.msra.mxu0 %v600
  %659 = vmatpush.msra.mxu0 %v599
  %660 = vmatpush.msra.mxu0 %v598
  %661 = vmatpush.msra.mxu0 %v597
  %662 = vmatpush.msra.mxu0 %v596
  %663 = vmatpush.msra.mxu0 %v595
  %664 = vmatpush.msra.mxu0 %v594
  %665 = vmatpush.msra.mxu0 %v593
  %666 = vmatpush.msra.mxu0 %v592
  %667 = vmatpush.msra.mxu0 %v591
  %668 = vmatpush.msra.mxu0 %v590
  %669 = vmatpush.msra.mxu0 %v589
  %670 = vmatpush.msra.mxu0 %v588
  %671 = vmatmul.f32.gmra.mxu0 %v564
  %v672 = vpop.f32.mrf.mxu0
  %v673 = vadd.f32 0.0, %v672
  %674 = vmatmul.f32.gmra.mxu0 %v566
  %v675 = vpop.f32.mrf.mxu0
  %v676 = vadd.f32 0.0, %v675
  %677 = vmatmul.f32.gmra.mxu0 %v568
  %v678 = vpop.f32.mrf.mxu0
  %v679 = vadd.f32 0.0, %v678
  %680 = vmatmul.f32.gmra.mxu0 %v570
  %v681 = vpop.f32.mrf.mxu0
  %v682 = vadd.f32 0.0, %v681
  %683 = vmatmul.f32.gmra.mxu0 %v572
  %v684 = vpop.f32.mrf.mxu0
  %v685 = vadd.f32 0.0, %v684
  %686 = vmatmul.f32.gmra.mxu0 %v574
  %v687 = vpop.f32.mrf.mxu0
  %v688 = vadd.f32 0.0, %v687
  %689 = vmatmul.f32.gmra.mxu0 %v576
  %v690 = vpop.f32.mrf.mxu0
  %v691 = vadd.f32 0.0, %v690
  %692 = vmatmul.f32.gmra.mxu0 %v578
  %v693 = vpop.f32.mrf.mxu0
  %v694 = vadd.f32 0.0, %v693
  %695 = vmatmul.f32.gmra.mxu0 %v580
  %v696 = vpop.f32.mrf.mxu0
  %v697 = vadd.f32 0.0, %v696
  %698 = vmatmul.f32.gmra.mxu0 %v582
  %v699 = vpop.f32.mrf.mxu0
  %v700 = vadd.f32 0.0, %v699
  %701 = vmatmul.f32.gmra.mxu0 %v584
  %v702 = vpop.f32.mrf.mxu0
  %v703 = vadd.f32 0.0, %v702
  %704 = vmatmul.f32.gmra.mxu0 %v586
  %v705 = vpop.f32.mrf.mxu0
  %v706 = vadd.f32 0.0, %v705
  %707 = vdwg.mxu0
  %708 = vmatpush.msra.mxu0 0.0
  %709 = vmatpush.msra.mxu0 0.0
  %710 = vmatpush.msra.mxu0 %v617
  %711 = vmatpush.msra.mxu0 %v616
  %712 = vmatpush.msra.mxu0 %v615
  %713 = vmatpush.msra.mxu0 %v614
  %714 = vmatpush.msra.mxu0 %v613
  %715 = vmatpush.msra.mxu0 %v612
  %716 = vmatpush.msra.mxu0 %v611
  %717 = vmatpush.msra.mxu0 %v610
  %718 = vmatpush.msra.mxu0 %v609
  %719 = vmatpush.msra.mxu0 %v608
  %720 = vmatpush.msra.mxu0 %v607
  %721 = vmatpush.msra.mxu0 %v606
  %722 = vmatpush.msra.mxu0 %v605
  %723 = vmatpush.msra.mxu0 %v604
  %724 = vmatmul.f32.gmra.mxu0 %v620
  %v725 = vpop.f32.mrf.mxu0
  %v726 = vadd.f32 %v673, %v725
  %727 = vmatmul.f32.gmra.mxu0 %v623
  %v728 = vpop.f32.mrf.mxu0
  %v729 = vadd.f32 %v676, %v728
  %730 = vmatmul.f32.gmra.mxu0 %v626
  %v731 = vpop.f32.mrf.mxu0
  %v732 = vadd.f32 %v679, %v731
  %733 = vmatmul.f32.gmra.mxu0 %v629
  %v734 = vpop.f32.mrf.mxu0
  %v735 = vadd.f32 %v682, %v734
  %736 = vmatmul.f32.gmra.mxu0 %v632
  %v737 = vpop.f32.mrf.mxu0
  %v738 = vadd.f32 %v685, %v737
  %739 = vmatmul.f32.gmra.mxu0 %v635
  %v740 = vpop.f32.mrf.mxu0
  %v741 = vadd.f32 %v688, %v740
  %742 = vmatmul.f32.gmra.mxu0 %v638
  %v743 = vpop.f32.mrf.mxu0
  %v744 = vadd.f32 %v691, %v743
  %745 = vmatmul.f32.gmra.mxu0 %v641
  %v746 = vpop.f32.mrf.mxu0
  %v747 = vadd.f32 %v694, %v746
  %748 = vmatmul.f32.gmra.mxu0 %v644
  %v749 = vpop.f32.mrf.mxu0
  %v750 = vadd.f32 %v697, %v749
  %751 = vmatmul.f32.gmra.mxu0 %v647
  %v752 = vpop.f32.mrf.mxu0
  %v753 = vadd.f32 %v700, %v752
  %754 = vmatmul.f32.gmra.mxu0 %v650
  %v755 = vpop.f32.mrf.mxu0
  %v756 = vadd.f32 %v703, %v755
  %757 = vmatmul.f32.gmra.mxu0 %v653
  %v758 = vpop.f32.mrf.mxu0
  %v759 = vadd.f32 %v706, %v758
  %760 = vdwg.mxu0
  %s761 = scalar_lea.vmem %s5, 240
  %v762 = vld [vmem:[%s761] sm:$0xff]
  %v763 = vld [vmem:[%s761 + $0x8] sm:$0xff]
  %v764 = vld [vmem:[%s761 + $0x10] sm:$0xff]
  %v765 = vld [vmem:[%s761 + $0x18] sm:$0xff]
  %v766 = vld [vmem:[%s761 + $0x20] sm:$0xff]
  %v767 = vld [vmem:[%s761 + $0x28] sm:$0xff]
  %v768 = vld [vmem:[%s761 + $0x30] sm:$0xff]
  %v769 = vld [vmem:[%s761 + $0x38] sm:$0xff]
  %v770 = vld [vmem:[%s761 + $0x40] sm:$0xff]
  %v771 = vld [vmem:[%s761 + $0x48] sm:$0xff]
  %v772 = vld [vmem:[%s761 + $0x50] sm:$0xff]
  %v773 = vld [vmem:[%s761 + $0x58] sm:$0xff]
  %v774 = vld [vmem:[%s761 + $0x60] sm:$0xff]
  %v775 = vld [vmem:[%s761 + $0x68] sm:$0xff]
  %v776 = vld [vmem:[%s761 + $0x70] sm:$0xff]
  %v777 = vld [vmem:[%s761 + $0x78] sm:$0xff]
  %v778 = vld [vmem:[%s761 + $0x80] sm:$0xff]
  %v779 = vld [vmem:[%s761 + $0x88] sm:$0xff]
  %v780 = vld [vmem:[%s761 + $0x90] sm:$0xff]
  %v781 = vld [vmem:[%s761 + $0x98] sm:$0xff]
  %v782 = vld [vmem:[%s761 + $0xa0] sm:$0xff]
  %v783 = vld [vmem:[%s761 + $0xa8] sm:$0xff]
  %v784 = vld [vmem:[%s761 + $0xb0] sm:$0xff]
  %v785 = vld [vmem:[%s761 + $0xb8] sm:$0xff]
  %v786 = vld [vmem:[%s761 + $0xc0] sm:$0xff]
  %v787 = vld [vmem:[%s761 + $0xc8] sm:$0xff]
  %v788 = vld [vmem:[%s761 + $0xd0] sm:$0xff]
  %v789 = vld [vmem:[%s761 + $0xd8] sm:$0xff]
  %v790 = vld [vmem:[%s761 + $0xe0] sm:$0xff]
  %v791 = vld [vmem:[%s761 + $0xe8] sm:$0xff]
  %792 = vmatpush.msra.mxu0 %v777
  %793 = vmatpush.msra.mxu0 %v776
  %794 = vmatpush.msra.mxu0 %v775
  %795 = vmatpush.msra.mxu0 %v774
  %796 = vmatpush.msra.mxu0 %v773
  %797 = vmatpush.msra.mxu0 %v772
  %798 = vmatpush.msra.mxu0 %v771
  %799 = vmatpush.msra.mxu0 %v770
  %800 = vmatpush.msra.mxu0 %v769
  %801 = vmatpush.msra.mxu0 %v768
  %802 = vmatpush.msra.mxu0 %v767
  %803 = vmatpush.msra.mxu0 %v766
  %804 = vmatpush.msra.mxu0 %v765
  %805 = vmatpush.msra.mxu0 %v764
  %806 = vmatpush.msra.mxu0 %v763
  %807 = vmatpush.msra.mxu0 %v762
  %808 = vmatmul.f32.gmra.mxu0 %v564
  %v809 = vpop.f32.mrf.mxu0
  %v810 = vadd.f32 0.0, %v809
  %811 = vmatmul.f32.gmra.mxu0 %v566
  %v812 = vpop.f32.mrf.mxu0
  %v813 = vadd.f32 0.0, %v812
  %814 = vmatmul.f32.gmra.mxu0 %v568
  %v815 = vpop.f32.mrf.mxu0
  %v816 = vadd.f32 0.0, %v815
  %817 = vmatmul.f32.gmra.mxu0 %v570
  %v818 = vpop.f32.mrf.mxu0
  %v819 = vadd.f32 0.0, %v818
  %820 = vmatmul.f32.gmra.mxu0 %v572
  %v821 = vpop.f32.mrf.mxu0
  %v822 = vadd.f32 0.0, %v821
  %823 = vmatmul.f32.gmra.mxu0 %v574
  %v824 = vpop.f32.mrf.mxu0
  %v825 = vadd.f32 0.0, %v824
  %826 = vmatmul.f32.gmra.mxu0 %v576
  %v827 = vpop.f32.mrf.mxu0
  %v828 = vadd.f32 0.0, %v827
  %829 = vmatmul.f32.gmra.mxu0 %v578
  %v830 = vpop.f32.mrf.mxu0
  %v831 = vadd.f32 0.0, %v830
  %832 = vmatmul.f32.gmra.mxu0 %v580
  %v833 = vpop.f32.mrf.mxu0
  %v834 = vadd.f32 0.0, %v833
  %835 = vmatmul.f32.gmra.mxu0 %v582
  %v836 = vpop.f32.mrf.mxu0
  %v837 = vadd.f32 0.0, %v836
  %838 = vmatmul.f32.gmra.mxu0 %v584
  %v839 = vpop.f32.mrf.mxu0
  %v840 = vadd.f32 0.0, %v839
  %841 = vmatmul.f32.gmra.mxu0 %v586
  %v842 = vpop.f32.mrf.mxu0
  %v843 = vadd.f32 0.0, %v842
  %844 = vdwg.mxu0
  %845 = vmatpush.msra.mxu0 0.0
  %846 = vmatpush.msra.mxu0 0.0
  %847 = vmatpush.msra.mxu0 %v791
  %848 = vmatpush.msra.mxu0 %v790
  %849 = vmatpush.msra.mxu0 %v789
  %850 = vmatpush.msra.mxu0 %v788
  %851 = vmatpush.msra.mxu0 %v787
  %852 = vmatpush.msra.mxu0 %v786
  %853 = vmatpush.msra.mxu0 %v785
  %854 = vmatpush.msra.mxu0 %v784
  %855 = vmatpush.msra.mxu0 %v783
  %856 = vmatpush.msra.mxu0 %v782
  %857 = vmatpush.msra.mxu0 %v781
  %858 = vmatpush.msra.mxu0 %v780
  %859 = vmatpush.msra.mxu0 %v779
  %860 = vmatpush.msra.mxu0 %v778
  %861 = vmatmul.f32.gmra.mxu0 %v620
  %v862 = vpop.f32.mrf.mxu0
  %v863 = vadd.f32 %v810, %v862
  %864 = vmatmul.f32.gmra.mxu0 %v623
  %v865 = vpop.f32.mrf.mxu0
  %v866 = vadd.f32 %v813, %v865
  %867 = vmatmul.f32.gmra.mxu0 %v626
  %v868 = vpop.f32.mrf.mxu0
  %v869 = vadd.f32 %v816, %v868
  %870 = vmatmul.f32.gmra.mxu0 %v629
  %v871 = vpop.f32.mrf.mxu0
  %v872 = vadd.f32 %v819, %v871
  %873 = vmatmul.f32.gmra.mxu0 %v632
  %v874 = vpop.f32.mrf.mxu0
  %v875 = vadd.f32 %v822, %v874
  %876 = vmatmul.f32.gmra.mxu0 %v635
  %v877 = vpop.f32.mrf.mxu0
  %v878 = vadd.f32 %v825, %v877
  %879 = vmatmul.f32.gmra.mxu0 %v638
  %v880 = vpop.f32.mrf.mxu0
  %v881 = vadd.f32 %v828, %v880
  %882 = vmatmul.f32.gmra.mxu0 %v641
  %v883 = vpop.f32.mrf.mxu0
  %v884 = vadd.f32 %v831, %v883
  %885 = vmatmul.f32.gmra.mxu0 %v644
  %v886 = vpop.f32.mrf.mxu0
  %v887 = vadd.f32 %v834, %v886
  %888 = vmatmul.f32.gmra.mxu0 %v647
  %v889 = vpop.f32.mrf.mxu0
  %v890 = vadd.f32 %v837, %v889
  %891 = vmatmul.f32.gmra.mxu0 %v650
  %v892 = vpop.f32.mrf.mxu0
  %v893 = vadd.f32 %v840, %v892
  %894 = vmatmul.f32.gmra.mxu0 %v653
  %v895 = vpop.f32.mrf.mxu0
  %v896 = vadd.f32 %v843, %v895
  %897 = vdwg.mxu0
  %v898 = vmax.f32 %v726, %v863
  %v899 = vmax.f32 %v729, %v866
  %v900 = vmax.f32 %v732, %v869
  %v901 = vmax.f32 %v735, %v872
  %v902 = vmax.f32 %v738, %v875
  %v903 = vmax.f32 %v741, %v878
  %v904 = vmax.f32 %v744, %v881
  %v905 = vmax.f32 %v747, %v884
  %v906 = vmax.f32 %v750, %v887
  %v907 = vmax.f32 %v753, %v890
  %v908 = vmax.f32 %v756, %v893
  %v909 = vmax.f32 %v759, %v896
  %v910 = vmax.f32 %v898, 0.0
  %v911 = vmax.f32 %v899, 0.0
  %v912 = vmax.f32 %v900, 0.0
  %v913 = vmax.f32 %v901, 0.0
  %v914 = vmax.f32 %v902, 0.0
  %v915 = vmax.f32 %v903, 0.0
  %v916 = vmax.f32 %v904, 0.0
  %v917 = vmax.f32 %v905, 0.0
  %v918 = vmax.f32 %v906, 0.0
  %v919 = vmax.f32 %v907, 0.0
  %v920 = vmax.f32 %v908, 0.0
  %v921 = vmax.f32 %v909, 0.0
  %v922 = vld [vmem:[%s3] sm:$0xff]
  %v923 = vld [vmem:[%s3 + $0x8] sm:$0xff]
  %v924 = vld [vmem:[%s3 + $0x10] sm:$0xff]
  %v925 = vld [vmem:[%s3 + $0x18] sm:$0xff]
  %v926 = vld [vmem:[%s3 + $0x20] sm:$0xff]
  %v927 = vld [vmem:[%s3 + $0x28] sm:$0xff]
  %v928 = vld [vmem:[%s3 + $0x30] sm:$0xff]
  %v929 = vld [vmem:[%s3 + $0x38] sm:$0xff]
  %v930 = vld [vmem:[%s3 + $0x40] sm:$0xff]
  %v931 = vld [vmem:[%s3 + $0x48] sm:$0xff]
  %v932 = vld [vmem:[%s3 + $0x50] sm:$0xff]
  %v933 = vld [vmem:[%s3 + $0x58] sm:$0xff]
  %v934 = vld [vmem:[%s3 + $0x60] sm:$0xff]
  %v935 = vld [vmem:[%s3 + $0x68] sm:$0xff]
  %v936 = vld [vmem:[%s3 + $0x70] sm:$0xff]
  %v937 = vld [vmem:[%s3 + $0x78] sm:$0xff]
  %v938 = vld [vmem:[%s3 + $0x80] sm:$0xff]
  %v939 = vld [vmem:[%s3 + $0x88] sm:$0xff]
  %v940 = vld [vmem:[%s3 + $0x90] sm:$0xff]
  %v941 = vld [vmem:[%s3 + $0x98] sm:$0xff]
  %v942 = vld [vmem:[%s3 + $0xa0] sm:$0xff]
  %v943 = vld [vmem:[%s3 + $0xa8] sm:$0xff]
  %v944 = vld [vmem:[%s3 + $0xb0] sm:$0xff]
  %v945 = vld [vmem:[%s3 + $0xb8] sm:$0xff]
  %v946 = vld [vmem:[%s3 + $0xc0] sm:$0xff]
  %v947 = vld [vmem:[%s3 + $0xc8] sm:$0xff]
  %v948 = vld [vmem:[%s3 + $0xd0] sm:$0xff]
  %v949 = vld [vmem:[%s3 + $0xd8] sm:$0xff]
  %v950 = vld [vmem:[%s3 + $0xe0] sm:$0xff]
  %v951 = vld [vmem:[%s3 + $0xe8] sm:$0xff]
  %s952 = scalar_lea.vmem %s3, 240
  %v953 = vld [vmem:[%s952] sm:$0xff]
  %v954 = vld [vmem:[%s952 + $0x8] sm:$0xff]
  %v955 = vld [vmem:[%s952 + $0x10] sm:$0xff]
  %v956 = vld [vmem:[%s952 + $0x18] sm:$0xff]
  %v957 = vld [vmem:[%s952 + $0x20] sm:$0xff]
  %v958 = vld [vmem:[%s952 + $0x28] sm:$0xff]
  %v959 = vld [vmem:[%s952 + $0x30] sm:$0xff]
  %v960 = vld [vmem:[%s952 + $0x38] sm:$0xff]
  %v961 = vld [vmem:[%s952 + $0x40] sm:$0xff]
  %v962 = vld [vmem:[%s952 + $0x48] sm:$0xff]
  %v963 = vld [vmem:[%s952 + $0x50] sm:$0xff]
  %v964 = vld [vmem:[%s952 + $0x58] sm:$0xff]
  %v965 = vld [vmem:[%s952 + $0x60] sm:$0xff]
  %v966 = vld [vmem:[%s952 + $0x68] sm:$0xff]
  %v967 = vld [vmem:[%s952 + $0x70] sm:$0xff]
  %v968 = vld [vmem:[%s952 + $0x78] sm:$0xff]
  %v969 = vld [vmem:[%s952 + $0x80] sm:$0xff]
  %v970 = vld [vmem:[%s952 + $0x88] sm:$0xff]
  %v971 = vld [vmem:[%s952 + $0x90] sm:$0xff]
  %v972 = vld [vmem:[%s952 + $0x98] sm:$0xff]
  %v973 = vld [vmem:[%s952 + $0xa0] sm:$0xff]
  %v974 = vld [vmem:[%s952 + $0xa8] sm:$0xff]
  %v975 = vld [vmem:[%s952 + $0xb0] sm:$0xff]
  %v976 = vld [vmem:[%s952 + $0xb8] sm:$0xff]
  %v977 = vld [vmem:[%s952 + $0xc0] sm:$0xff]
  %v978 = vld [vmem:[%s952 + $0xc8] sm:$0xff]
  %v979 = vld [vmem:[%s952 + $0xd0] sm:$0xff]
  %v980 = vld [vmem:[%s952 + $0xd8] sm:$0xff]
  %v981 = vld [vmem:[%s952 + $0xe0] sm:$0xff]
  %v982 = vld [vmem:[%s952 + $0xe8] sm:$0xff]
  %vm983 = vcmask 982016
  %v985 = vsel %vm983, %v916, 0
  %v988 = vsel %vm983, %v917, 0
  %v991 = vsel %vm983, %v918, 0
  %v994 = vsel %vm983, %v919, 0
  %996 = vmatpush.msra.mxu0 0.0
  %997 = vmatpush.msra.mxu0 %v981
  %998 = vmatpush.msra.mxu0 %v979
  %999 = vmatpush.msra.mxu0 %v977
  %1000 = vmatpush.msra.mxu0 %v975
  %1001 = vmatpush.msra.mxu0 %v973
  %1002 = vmatpush.msra.mxu0 %v971
  %1003 = vmatpush.msra.mxu0 %v969
  %1004 = vmatpush.msra.mxu0 %v967
  %1005 = vmatpush.msra.mxu0 %v965
  %1006 = vmatpush.msra.mxu0 %v963
  %1007 = vmatpush.msra.mxu0 %v961
  %1008 = vmatpush.msra.mxu0 %v959
  %1009 = vmatpush.msra.mxu0 %v957
  %1010 = vmatpush.msra.mxu0 %v955
  %1011 = vmatpush.msra.mxu0 %v953
  %1012 = vmatmul.f32.gmra.mxu0 %v985
  %v1013 = vpop.f32.mrf.mxu0
  %v1014 = vadd.f32 0.0, %v1013
  %1015 = vmatmul.f32.gmra.mxu0 %v988
  %v1016 = vpop.f32.mrf.mxu0
  %v1017 = vadd.f32 0.0, %v1016
  %1018 = vmatmul.f32.gmra.mxu0 %v991
  %v1019 = vpop.f32.mrf.mxu0
  %v1020 = vadd.f32 0.0, %v1019
  %1021 = vmatmul.f32.gmra.mxu0 %v994
  %v1022 = vpop.f32.mrf.mxu0
  %v1023 = vadd.f32 0.0, %v1022
  %1024 = vdwg.mxu0
  %1025 = vmatpush.msra.mxu0 0.0
  %1026 = vmatpush.msra.mxu0 %v982
  %1027 = vmatpush.msra.mxu0 %v980
  %1028 = vmatpush.msra.mxu0 %v978
  %1029 = vmatpush.msra.mxu0 %v976
  %1030 = vmatpush.msra.mxu0 %v974
  %1031 = vmatpush.msra.mxu0 %v972
  %1032 = vmatpush.msra.mxu0 %v970
  %1033 = vmatpush.msra.mxu0 %v968
  %1034 = vmatpush.msra.mxu0 %v966
  %1035 = vmatpush.msra.mxu0 %v964
  %1036 = vmatpush.msra.mxu0 %v962
  %1037 = vmatpush.msra.mxu0 %v960
  %1038 = vmatpush.msra.mxu0 %v958
  %1039 = vmatpush.msra.mxu0 %v956
  %1040 = vmatpush.msra.mxu0 %v954
  %1041 = vmatmul.f32.gmra.mxu0 %v985
  %v1042 = vpop.f32.mrf.mxu0
  %v1043 = vadd.f32 0.0, %v1042
  %1044 = vmatmul.f32.gmra.mxu0 %v988
  %v1045 = vpop.f32.mrf.mxu0
  %v1046 = vadd.f32 0.0, %v1045
  %1047 = vmatmul.f32.gmra.mxu0 %v991
  %v1048 = vpop.f32.mrf.mxu0
  %v1049 = vadd.f32 0.0, %v1048
  %1050 = vmatmul.f32.gmra.mxu0 %v994
  %v1051 = vpop.f32.mrf.mxu0
  %v1052 = vadd.f32 0.0, %v1051
  %1053 = vdwg.mxu0
  %v1055 = vsel %vm983, %v910, 0
  %v1058 = vsel %vm983, %v911, 0
  %v1061 = vsel %vm983, %v912, 0
  %v1064 = vsel %vm983, %v913, 0
  %1066 = vmatpush.msra.mxu0 0.0
  %1067 = vmatpush.msra.mxu0 %v950
  %1068 = vmatpush.msra.mxu0 %v948
  %1069 = vmatpush.msra.mxu0 %v946
  %1070 = vmatpush.msra.mxu0 %v944
  %1071 = vmatpush.msra.mxu0 %v942
  %1072 = vmatpush.msra.mxu0 %v940
  %1073 = vmatpush.msra.mxu0 %v938
  %1074 = vmatpush.msra.mxu0 %v936
  %1075 = vmatpush.msra.mxu0 %v934
  %1076 = vmatpush.msra.mxu0 %v932
  %1077 = vmatpush.msra.mxu0 %v930
  %1078 = vmatpush.msra.mxu0 %v928
  %1079 = vmatpush.msra.mxu0 %v926
  %1080 = vmatpush.msra.mxu0 %v924
  %1081 = vmatpush.msra.mxu0 %v922
  %1082 = vmatmul.f32.gmra.mxu0 %v1055
  %v1083 = vpop.f32.mrf.mxu0
  %v1084 = vadd.f32 %v1014, %v1083
  %1085 = vmatmul.f32.gmra.mxu0 %v1058
  %v1086 = vpop.f32.mrf.mxu0
  %v1087 = vadd.f32 %v1017, %v1086
  %1088 = vmatmul.f32.gmra.mxu0 %v1061
  %v1089 = vpop.f32.mrf.mxu0
  %v1090 = vadd.f32 %v1020, %v1089
  %1091 = vmatmul.f32.gmra.mxu0 %v1064
  %v1092 = vpop.f32.mrf.mxu0
  %v1093 = vadd.f32 %v1023, %v1092
  %1094 = vdwg.mxu0
  %1095 = vmatpush.msra.mxu0 0.0
  %1096 = vmatpush.msra.mxu0 %v951
  %1097 = vmatpush.msra.mxu0 %v949
  %1098 = vmatpush.msra.mxu0 %v947
  %1099 = vmatpush.msra.mxu0 %v945
  %1100 = vmatpush.msra.mxu0 %v943
  %1101 = vmatpush.msra.mxu0 %v941
  %1102 = vmatpush.msra.mxu0 %v939
  %1103 = vmatpush.msra.mxu0 %v937
  %1104 = vmatpush.msra.mxu0 %v935
  %1105 = vmatpush.msra.mxu0 %v933
  %1106 = vmatpush.msra.mxu0 %v931
  %1107 = vmatpush.msra.mxu0 %v929
  %1108 = vmatpush.msra.mxu0 %v927
  %1109 = vmatpush.msra.mxu0 %v925
  %1110 = vmatpush.msra.mxu0 %v923
  %1111 = vmatmul.f32.gmra.mxu0 %v1055
  %v1112 = vpop.f32.mrf.mxu0
  %v1113 = vadd.f32 %v1043, %v1112
  %1114 = vmatmul.f32.gmra.mxu0 %v1058
  %v1115 = vpop.f32.mrf.mxu0
  %v1116 = vadd.f32 %v1046, %v1115
  %1117 = vmatmul.f32.gmra.mxu0 %v1061
  %v1118 = vpop.f32.mrf.mxu0
  %v1119 = vadd.f32 %v1049, %v1118
  %1120 = vmatmul.f32.gmra.mxu0 %v1064
  %v1121 = vpop.f32.mrf.mxu0
  %v1122 = vadd.f32 %v1052, %v1121
  %1123 = vdwg.mxu0
  %v1125 = vsel %vm983, %v914, 0
  %1127 = vmatpush.msra.mxu0 0.0
  %1128 = vmatpush.msra.mxu0 %v981
  %1129 = vmatpush.msra.mxu0 %v979
  %1130 = vmatpush.msra.mxu0 %v977
  %1131 = vmatpush.msra.mxu0 %v975
  %1132 = vmatpush.msra.mxu0 %v973
  %1133 = vmatpush.msra.mxu0 %v971
  %1134 = vmatpush.msra.mxu0 %v969
  %1135 = vmatpush.msra.mxu0 %v967
  %1136 = vmatpush.msra.mxu0 %v965
  %1137 = vmatpush.msra.mxu0 %v963
  %1138 = vmatpush.msra.mxu0 %v961
  %1139 = vmatpush.msra.mxu0 %v959
  %1140 = vmatpush.msra.mxu0 %v957
  %1141 = vmatpush.msra.mxu0 %v955
  %1142 = vmatpush.msra.mxu0 %v953
  %1143 = vmatmul.f32.gmra.mxu0 %v1058
  %v1144 = vpop.f32.mrf.mxu0
  %v1145 = vadd.f32 0.0, %v1144
  %1146 = vmatmul.f32.gmra.mxu0 %v1061
  %v1147 = vpop.f32.mrf.mxu0
  %v1148 = vadd.f32 0.0, %v1147
  %1149 = vmatmul.f32.gmra.mxu0 %v1064
  %v1150 = vpop.f32.mrf.mxu0
  %v1151 = vadd.f32 0.0, %v1150
  %1152 = vmatmul.f32.gmra.mxu0 %v1125
  %v1153 = vpop.f32.mrf.mxu0
  %v1154 = vadd.f32 0.0, %v1153
  %1155 = vdwg.mxu0
  %1156 = vmatpush.msra.mxu0 0.0
  %1157 = vmatpush.msra.mxu0 %v982
  %1158 = vmatpush.msra.mxu0 %v980
  %1159 = vmatpush.msra.mxu0 %v978
  %1160 = vmatpush.msra.mxu0 %v976
  %1161 = vmatpush.msra.mxu0 %v974
  %1162 = vmatpush.msra.mxu0 %v972
  %1163 = vmatpush.msra.mxu0 %v970
  %1164 = vmatpush.msra.mxu0 %v968
  %1165 = vmatpush.msra.mxu0 %v966
  %1166 = vmatpush.msra.mxu0 %v964
  %1167 = vmatpush.msra.mxu0 %v962
  %1168 = vmatpush.msra.mxu0 %v960
  %1169 = vmatpush.msra.mxu0 %v958
  %1170 = vmatpush.msra.mxu0 %v956
  %1171 = vmatpush.msra.mxu0 %v954
  %1172 = vmatmul.f32.gmra.mxu0 %v1058
  %v1173 = vpop.f32.mrf.mxu0
  %v1174 = vadd.f32 0.0, %v1173
  %1175 = vmatmul.f32.gmra.mxu0 %v1061
  %v1176 = vpop.f32.mrf.mxu0
  %v1177 = vadd.f32 0.0, %v1176
  %1178 = vmatmul.f32.gmra.mxu0 %v1064
  %v1179 = vpop.f32.mrf.mxu0
  %v1180 = vadd.f32 0.0, %v1179
  %1181 = vmatmul.f32.gmra.mxu0 %v1125
  %v1182 = vpop.f32.mrf.mxu0
  %v1183 = vadd.f32 0.0, %v1182
  %1184 = vdwg.mxu0
  %1185 = vmatpush.msra.mxu0 0.0
  %1186 = vmatpush.msra.mxu0 %v950
  %1187 = vmatpush.msra.mxu0 %v948
  %1188 = vmatpush.msra.mxu0 %v946
  %1189 = vmatpush.msra.mxu0 %v944
  %1190 = vmatpush.msra.mxu0 %v942
  %1191 = vmatpush.msra.mxu0 %v940
  %1192 = vmatpush.msra.mxu0 %v938
  %1193 = vmatpush.msra.mxu0 %v936
  %1194 = vmatpush.msra.mxu0 %v934
  %1195 = vmatpush.msra.mxu0 %v932
  %1196 = vmatpush.msra.mxu0 %v930
  %1197 = vmatpush.msra.mxu0 %v928
  %1198 = vmatpush.msra.mxu0 %v926
  %1199 = vmatpush.msra.mxu0 %v924
  %1200 = vmatpush.msra.mxu0 %v922
  %1201 = vmatmul.f32.gmra.mxu0 %v985
  %v1202 = vpop.f32.mrf.mxu0
  %v1203 = vadd.f32 %v1145, %v1202
  %1204 = vmatmul.f32.gmra.mxu0 %v988
  %v1205 = vpop.f32.mrf.mxu0
  %v1206 = vadd.f32 %v1148, %v1205
  %1207 = vmatmul.f32.gmra.mxu0 %v991
  %v1208 = vpop.f32.mrf.mxu0
  %v1209 = vadd.f32 %v1151, %v1208
  %1210 = vmatmul.f32.gmra.mxu0 %v994
  %v1211 = vpop.f32.mrf.mxu0
  %v1212 = vadd.f32 %v1154, %v1211
  %1213 = vdwg.mxu0
  %1214 = vmatpush.msra.mxu0 0.0
  %1215 = vmatpush.msra.mxu0 %v951
  %1216 = vmatpush.msra.mxu0 %v949
  %1217 = vmatpush.msra.mxu0 %v947
  %1218 = vmatpush.msra.mxu0 %v945
  %1219 = vmatpush.msra.mxu0 %v943
  %1220 = vmatpush.msra.mxu0 %v941
  %1221 = vmatpush.msra.mxu0 %v939
  %1222 = vmatpush.msra.mxu0 %v937
  %1223 = vmatpush.msra.mxu0 %v935
  %1224 = vmatpush.msra.mxu0 %v933
  %1225 = vmatpush.msra.mxu0 %v931
  %1226 = vmatpush.msra.mxu0 %v929
  %1227 = vmatpush.msra.mxu0 %v927
  %1228 = vmatpush.msra.mxu0 %v925
  %1229 = vmatpush.msra.mxu0 %v923
  %1230 = vmatmul.f32.gmra.mxu0 %v985
  %v1231 = vpop.f32.mrf.mxu0
  %v1232 = vadd.f32 %v1174, %v1231
  %1233 = vmatmul.f32.gmra.mxu0 %v988
  %v1234 = vpop.f32.mrf.mxu0
  %v1235 = vadd.f32 %v1177, %v1234
  %1236 = vmatmul.f32.gmra.mxu0 %v991
  %v1237 = vpop.f32.mrf.mxu0
  %v1238 = vadd.f32 %v1180, %v1237
  %1239 = vmatmul.f32.gmra.mxu0 %v994
  %v1240 = vpop.f32.mrf.mxu0
  %v1241 = vadd.f32 %v1183, %v1240
  %1242 = vdwg.mxu0
  %s1243 = scalar_lea.vmem %s3, 480
  %v1244 = vld [vmem:[%s1243] sm:$0xff]
  %v1245 = vld [vmem:[%s1243 + $0x8] sm:$0xff]
  %v1246 = vld [vmem:[%s1243 + $0x10] sm:$0xff]
  %v1247 = vld [vmem:[%s1243 + $0x18] sm:$0xff]
  %v1248 = vld [vmem:[%s1243 + $0x20] sm:$0xff]
  %v1249 = vld [vmem:[%s1243 + $0x28] sm:$0xff]
  %v1250 = vld [vmem:[%s1243 + $0x30] sm:$0xff]
  %v1251 = vld [vmem:[%s1243 + $0x38] sm:$0xff]
  %v1252 = vld [vmem:[%s1243 + $0x40] sm:$0xff]
  %v1253 = vld [vmem:[%s1243 + $0x48] sm:$0xff]
  %v1254 = vld [vmem:[%s1243 + $0x50] sm:$0xff]
  %v1255 = vld [vmem:[%s1243 + $0x58] sm:$0xff]
  %v1256 = vld [vmem:[%s1243 + $0x60] sm:$0xff]
  %v1257 = vld [vmem:[%s1243 + $0x68] sm:$0xff]
  %v1258 = vld [vmem:[%s1243 + $0x70] sm:$0xff]
  %v1259 = vld [vmem:[%s1243 + $0x78] sm:$0xff]
  %v1260 = vld [vmem:[%s1243 + $0x80] sm:$0xff]
  %v1261 = vld [vmem:[%s1243 + $0x88] sm:$0xff]
  %v1262 = vld [vmem:[%s1243 + $0x90] sm:$0xff]
  %v1263 = vld [vmem:[%s1243 + $0x98] sm:$0xff]
  %v1264 = vld [vmem:[%s1243 + $0xa0] sm:$0xff]
  %v1265 = vld [vmem:[%s1243 + $0xa8] sm:$0xff]
  %v1266 = vld [vmem:[%s1243 + $0xb0] sm:$0xff]
  %v1267 = vld [vmem:[%s1243 + $0xb8] sm:$0xff]
  %v1268 = vld [vmem:[%s1243 + $0xc0] sm:$0xff]
  %v1269 = vld [vmem:[%s1243 + $0xc8] sm:$0xff]
  %v1270 = vld [vmem:[%s1243 + $0xd0] sm:$0xff]
  %v1271 = vld [vmem:[%s1243 + $0xd8] sm:$0xff]
  %v1272 = vld [vmem:[%s1243 + $0xe0] sm:$0xff]
  %v1273 = vld [vmem:[%s1243 + $0xe8] sm:$0xff]
  %1274 = vmatpush.msra.mxu0 0.0
  %1275 = vmatpush.msra.mxu0 %v1272
  %1276 = vmatpush.msra.mxu0 %v1270
  %1277 = vmatpush.msra.mxu0 %v1268
  %1278 = vmatpush.msra.mxu0 %v1266
  %1279 = vmatpush.msra.mxu0 %v1264
  %1280 = vmatpush.msra.mxu0 %v1262
  %1281 = vmatpush.msra.mxu0 %v1260
  %1282 = vmatpush.msra.mxu0 %v1258
  %1283 = vmatpush.msra.mxu0 %v1256
  %1284 = vmatpush.msra.mxu0 %v1254
  %1285 = vmatpush.msra.mxu0 %v1252
  %1286 = vmatpush.msra.mxu0 %v1250
  %1287 = vmatpush.msra.mxu0 %v1248
  %1288 = vmatpush.msra.mxu0 %v1246
  %1289 = vmatpush.msra.mxu0 %v1244
  %1290 = vmatmul.f32.gmra.mxu0 %v1058
  %v1291 = vpop.f32.mrf.mxu0
  %v1292 = vadd.f32 0.0, %v1291
  %1293 = vmatmul.f32.gmra.mxu0 %v1061
  %v1294 = vpop.f32.mrf.mxu0
  %v1295 = vadd.f32 0.0, %v1294
  %1296 = vmatmul.f32.gmra.mxu0 %v1064
  %v1297 = vpop.f32.mrf.mxu0
  %v1298 = vadd.f32 0.0, %v1297
  %1299 = vmatmul.f32.gmra.mxu0 %v1125
  %v1300 = vpop.f32.mrf.mxu0
  %v1301 = vadd.f32 0.0, %v1300
  %1302 = vdwg.mxu0
  %1303 = vmatpush.msra.mxu0 0.0
  %1304 = vmatpush.msra.mxu0 %v1273
  %1305 = vmatpush.msra.mxu0 %v1271
  %1306 = vmatpush.msra.mxu0 %v1269
  %1307 = vmatpush.msra.mxu0 %v1267
  %1308 = vmatpush.msra.mxu0 %v1265
  %1309 = vmatpush.msra.mxu0 %v1263
  %1310 = vmatpush.msra.mxu0 %v1261
  %1311 = vmatpush.msra.mxu0 %v1259
  %1312 = vmatpush.msra.mxu0 %v1257
  %1313 = vmatpush.msra.mxu0 %v1255
  %1314 = vmatpush.msra.mxu0 %v1253
  %1315 = vmatpush.msra.mxu0 %v1251
  %1316 = vmatpush.msra.mxu0 %v1249
  %1317 = vmatpush.msra.mxu0 %v1247
  %1318 = vmatpush.msra.mxu0 %v1245
  %1319 = vmatmul.f32.gmra.mxu0 %v1058
  %v1320 = vpop.f32.mrf.mxu0
  %v1321 = vadd.f32 0.0, %v1320
  %1322 = vmatmul.f32.gmra.mxu0 %v1061
  %v1323 = vpop.f32.mrf.mxu0
  %v1324 = vadd.f32 0.0, %v1323
  %1325 = vmatmul.f32.gmra.mxu0 %v1064
  %v1326 = vpop.f32.mrf.mxu0
  %v1327 = vadd.f32 0.0, %v1326
  %1328 = vmatmul.f32.gmra.mxu0 %v1125
  %v1329 = vpop.f32.mrf.mxu0
  %v1330 = vadd.f32 0.0, %v1329
  %1331 = vdwg.mxu0
  %v1332 = vadd.f32 %v1084, %v1292
  %v1333 = vadd.f32 %v1113, %v1321
  %v1334 = vadd.f32 %v1087, %v1295
  %v1335 = vadd.f32 %v1116, %v1324
  %v1336 = vadd.f32 %v1090, %v1298
  %v1337 = vadd.f32 %v1119, %v1327
  %v1338 = vadd.f32 %v1093, %v1301
  %v1339 = vadd.f32 %v1122, %v1330
  %v1341 = vsel %vm983, %v920, 0
  %1343 = vmatpush.msra.mxu0 0.0
  %1344 = vmatpush.msra.mxu0 %v1272
  %1345 = vmatpush.msra.mxu0 %v1270
  %1346 = vmatpush.msra.mxu0 %v1268
  %1347 = vmatpush.msra.mxu0 %v1266
  %1348 = vmatpush.msra.mxu0 %v1264
  %1349 = vmatpush.msra.mxu0 %v1262
  %1350 = vmatpush.msra.mxu0 %v1260
  %1351 = vmatpush.msra.mxu0 %v1258
  %1352 = vmatpush.msra.mxu0 %v1256
  %1353 = vmatpush.msra.mxu0 %v1254
  %1354 = vmatpush.msra.mxu0 %v1252
  %1355 = vmatpush.msra.mxu0 %v1250
  %1356 = vmatpush.msra.mxu0 %v1248
  %1357 = vmatpush.msra.mxu0 %v1246
  %1358 = vmatpush.msra.mxu0 %v1244
  %1359 = vmatmul.f32.gmra.mxu0 %v988
  %v1360 = vpop.f32.mrf.mxu0
  %v1361 = vadd.f32 0.0, %v1360
  %1362 = vmatmul.f32.gmra.mxu0 %v991
  %v1363 = vpop.f32.mrf.mxu0
  %v1364 = vadd.f32 0.0, %v1363
  %1365 = vmatmul.f32.gmra.mxu0 %v994
  %v1366 = vpop.f32.mrf.mxu0
  %v1367 = vadd.f32 0.0, %v1366
  %1368 = vmatmul.f32.gmra.mxu0 %v1341
  %v1369 = vpop.f32.mrf.mxu0
  %v1370 = vadd.f32 0.0, %v1369
  %1371 = vdwg.mxu0
  %1372 = vmatpush.msra.mxu0 0.0
  %1373 = vmatpush.msra.mxu0 %v1273
  %1374 = vmatpush.msra.mxu0 %v1271
  %1375 = vmatpush.msra.mxu0 %v1269
  %1376 = vmatpush.msra.mxu0 %v1267
  %1377 = vmatpush.msra.mxu0 %v1265
  %1378 = vmatpush.msra.mxu0 %v1263
  %1379 = vmatpush.msra.mxu0 %v1261
  %1380 = vmatpush.msra.mxu0 %v1259
  %1381 = vmatpush.msra.mxu0 %v1257
  %1382 = vmatpush.msra.mxu0 %v1255
  %1383 = vmatpush.msra.mxu0 %v1253
  %1384 = vmatpush.msra.mxu0 %v1251
  %1385 = vmatpush.msra.mxu0 %v1249
  %1386 = vmatpush.msra.mxu0 %v1247
  %1387 = vmatpush.msra.mxu0 %v1245
  %1388 = vmatmul.f32.gmra.mxu0 %v988
  %v1389 = vpop.f32.mrf.mxu0
  %v1390 = vadd.f32 0.0, %v1389
  %1391 = vmatmul.f32.gmra.mxu0 %v991
  %v1392 = vpop.f32.mrf.mxu0
  %v1393 = vadd.f32 0.0, %v1392
  %1394 = vmatmul.f32.gmra.mxu0 %v994
  %v1395 = vpop.f32.mrf.mxu0
  %v1396 = vadd.f32 0.0, %v1395
  %1397 = vmatmul.f32.gmra.mxu0 %v1341
  %v1398 = vpop.f32.mrf.mxu0
  %v1399 = vadd.f32 0.0, %v1398
  %1400 = vdwg.mxu0
  %v1401 = vadd.f32 %v1203, %v1361
  %v1402 = vadd.f32 %v1232, %v1390
  %v1403 = vadd.f32 %v1206, %v1364
  %v1404 = vadd.f32 %v1235, %v1393
  %v1405 = vadd.f32 %v1209, %v1367
  %v1406 = vadd.f32 %v1238, %v1396
  %v1407 = vadd.f32 %v1212, %v1370
  %v1408 = vadd.f32 %v1241, %v1399
  %s1409 = scalar_lea.vmem %s3, 720
  %v1410 = vld [vmem:[%s1409] sm:$0xff]
  %v1411 = vld [vmem:[%s1409 + $0x8] sm:$0xff]
  %v1412 = vld [vmem:[%s1409 + $0x10] sm:$0xff]
  %v1413 = vld [vmem:[%s1409 + $0x18] sm:$0xff]
  %v1414 = vld [vmem:[%s1409 + $0x20] sm:$0xff]
  %v1415 = vld [vmem:[%s1409 + $0x28] sm:$0xff]
  %v1416 = vld [vmem:[%s1409 + $0x30] sm:$0xff]
  %v1417 = vld [vmem:[%s1409 + $0x38] sm:$0xff]
  %v1418 = vld [vmem:[%s1409 + $0x40] sm:$0xff]
  %v1419 = vld [vmem:[%s1409 + $0x48] sm:$0xff]
  %v1420 = vld [vmem:[%s1409 + $0x50] sm:$0xff]
  %v1421 = vld [vmem:[%s1409 + $0x58] sm:$0xff]
  %v1422 = vld [vmem:[%s1409 + $0x60] sm:$0xff]
  %v1423 = vld [vmem:[%s1409 + $0x68] sm:$0xff]
  %v1424 = vld [vmem:[%s1409 + $0x70] sm:$0xff]
  %v1425 = vld [vmem:[%s1409 + $0x78] sm:$0xff]
  %v1426 = vld [vmem:[%s1409 + $0x80] sm:$0xff]
  %v1427 = vld [vmem:[%s1409 + $0x88] sm:$0xff]
  %v1428 = vld [vmem:[%s1409 + $0x90] sm:$0xff]
  %v1429 = vld [vmem:[%s1409 + $0x98] sm:$0xff]
  %v1430 = vld [vmem:[%s1409 + $0xa0] sm:$0xff]
  %v1431 = vld [vmem:[%s1409 + $0xa8] sm:$0xff]
  %v1432 = vld [vmem:[%s1409 + $0xb0] sm:$0xff]
  %v1433 = vld [vmem:[%s1409 + $0xb8] sm:$0xff]
  %v1434 = vld [vmem:[%s1409 + $0xc0] sm:$0xff]
  %v1435 = vld [vmem:[%s1409 + $0xc8] sm:$0xff]
  %v1436 = vld [vmem:[%s1409 + $0xd0] sm:$0xff]
  %v1437 = vld [vmem:[%s1409 + $0xd8] sm:$0xff]
  %v1438 = vld [vmem:[%s1409 + $0xe0] sm:$0xff]
  %v1439 = vld [vmem:[%s1409 + $0xe8] sm:$0xff]
  %1440 = vmatpush.msra.mxu0 0.0
  %1441 = vmatpush.msra.mxu0 %v1438
  %1442 = vmatpush.msra.mxu0 %v1436
  %1443 = vmatpush.msra.mxu0 %v1434
  %1444 = vmatpush.msra.mxu0 %v1432
  %1445 = vmatpush.msra.mxu0 %v1430
  %1446 = vmatpush.msra.mxu0 %v1428
  %1447 = vmatpush.msra.mxu0 %v1426
  %1448 = vmatpush.msra.mxu0 %v1424
  %1449 = vmatpush.msra.mxu0 %v1422
  %1450 = vmatpush.msra.mxu0 %v1420
  %1451 = vmatpush.msra.mxu0 %v1418
  %1452 = vmatpush.msra.mxu0 %v1416
  %1453 = vmatpush.msra.mxu0 %v1414
  %1454 = vmatpush.msra.mxu0 %v1412
  %1455 = vmatpush.msra.mxu0 %v1410
  %1456 = vmatmul.f32.gmra.mxu0 %v988
  %v1457 = vpop.f32.mrf.mxu0
  %v1458 = vadd.f32 0.0, %v1457
  %1459 = vmatmul.f32.gmra.mxu0 %v991
  %v1460 = vpop.f32.mrf.mxu0
  %v1461 = vadd.f32 0.0, %v1460
  %1462 = vmatmul.f32.gmra.mxu0 %v994
  %v1463 = vpop.f32.mrf.mxu0
  %v1464 = vadd.f32 0.0, %v1463
  %1465 = vmatmul.f32.gmra.mxu0 %v1341
  %v1466 = vpop.f32.mrf.mxu0
  %v1467 = vadd.f32 0.0, %v1466
  %1468 = vdwg.mxu0
  %1469 = vmatpush.msra.mxu0 0.0
  %1470 = vmatpush.msra.mxu0 %v1439
  %1471 = vmatpush.msra.mxu0 %v1437
  %1472 = vmatpush.msra.mxu0 %v1435
  %1473 = vmatpush.msra.mxu0 %v1433
  %1474 = vmatpush.msra.mxu0 %v1431
  %1475 = vmatpush.msra.mxu0 %v1429
  %1476 = vmatpush.msra.mxu0 %v1427
  %1477 = vmatpush.msra.mxu0 %v1425
  %1478 = vmatpush.msra.mxu0 %v1423
  %1479 = vmatpush.msra.mxu0 %v1421
  %1480 = vmatpush.msra.mxu0 %v1419
  %1481 = vmatpush.msra.mxu0 %v1417
  %1482 = vmatpush.msra.mxu0 %v1415
  %1483 = vmatpush.msra.mxu0 %v1413
  %1484 = vmatpush.msra.mxu0 %v1411
  %1485 = vmatmul.f32.gmra.mxu0 %v988
  %v1486 = vpop.f32.mrf.mxu0
  %v1487 = vadd.f32 0.0, %v1486
  %1488 = vmatmul.f32.gmra.mxu0 %v991
  %v1489 = vpop.f32.mrf.mxu0
  %v1490 = vadd.f32 0.0, %v1489
  %1491 = vmatmul.f32.gmra.mxu0 %v994
  %v1492 = vpop.f32.mrf.mxu0
  %v1493 = vadd.f32 0.0, %v1492
  %1494 = vmatmul.f32.gmra.mxu0 %v1341
  %v1495 = vpop.f32.mrf.mxu0
  %v1496 = vadd.f32 0.0, %v1495
  %1497 = vdwg.mxu0
  %v1498 = vadd.f32 %v1332, %v1458
  %v1499 = vadd.f32 %v1333, %v1487
  %v1500 = vadd.f32 %v1334, %v1461
  %v1501 = vadd.f32 %v1335, %v1490
  %v1502 = vadd.f32 %v1336, %v1464
  %v1503 = vadd.f32 %v1337, %v1493
  %v1504 = vadd.f32 %v1338, %v1467
  %v1505 = vadd.f32 %v1339, %v1496
  %v1507 = vsel %vm983, %v915, 0
  %1509 = vmatpush.msra.mxu0 0.0
  %1510 = vmatpush.msra.mxu0 %v1438
  %1511 = vmatpush.msra.mxu0 %v1436
  %1512 = vmatpush.msra.mxu0 %v1434
  %1513 = vmatpush.msra.mxu0 %v1432
  %1514 = vmatpush.msra.mxu0 %v1430
  %1515 = vmatpush.msra.mxu0 %v1428
  %1516 = vmatpush.msra.mxu0 %v1426
  %1517 = vmatpush.msra.mxu0 %v1424
  %1518 = vmatpush.msra.mxu0 %v1422
  %1519 = vmatpush.msra.mxu0 %v1420
  %1520 = vmatpush.msra.mxu0 %v1418
  %1521 = vmatpush.msra.mxu0 %v1416
  %1522 = vmatpush.msra.mxu0 %v1414
  %1523 = vmatpush.msra.mxu0 %v1412
  %1524 = vmatpush.msra.mxu0 %v1410
  %1525 = vmatmul.f32.gmra.mxu0 %v1061
  %v1526 = vpop.f32.mrf.mxu0
  %v1527 = vadd.f32 0.0, %v1526
  %1528 = vmatmul.f32.gmra.mxu0 %v1064
  %v1529 = vpop.f32.mrf.mxu0
  %v1530 = vadd.f32 0.0, %v1529
  %1531 = vmatmul.f32.gmra.mxu0 %v1125
  %v1532 = vpop.f32.mrf.mxu0
  %v1533 = vadd.f32 0.0, %v1532
  %1534 = vmatmul.f32.gmra.mxu0 %v1507
  %v1535 = vpop.f32.mrf.mxu0
  %v1536 = vadd.f32 0.0, %v1535
  %1537 = vdwg.mxu0
  %1538 = vmatpush.msra.mxu0 0.0
  %1539 = vmatpush.msra.mxu0 %v1439
  %1540 = vmatpush.msra.mxu0 %v1437
  %1541 = vmatpush.msra.mxu0 %v1435
  %1542 = vmatpush.msra.mxu0 %v1433
  %1543 = vmatpush.msra.mxu0 %v1431
  %1544 = vmatpush.msra.mxu0 %v1429
  %1545 = vmatpush.msra.mxu0 %v1427
  %1546 = vmatpush.msra.mxu0 %v1425
  %1547 = vmatpush.msra.mxu0 %v1423
  %1548 = vmatpush.msra.mxu0 %v1421
  %1549 = vmatpush.msra.mxu0 %v1419
  %1550 = vmatpush.msra.mxu0 %v1417
  %1551 = vmatpush.msra.mxu0 %v1415
  %1552 = vmatpush.msra.mxu0 %v1413
  %1553 = vmatpush.msra.mxu0 %v1411
  %1554 = vmatmul.f32.gmra.mxu0 %v1061
  %v1555 = vpop.f32.mrf.mxu0
  %v1556 = vadd.f32 0.0, %v1555
  %1557 = vmatmul.f32.gmra.mxu0 %v1064
  %v1558 = vpop.f32.mrf.mxu0
  %v1559 = vadd.f32 0.0, %v1558
  %1560 = vmatmul.f32.gmra.mxu0 %v1125
  %v1561 = vpop.f32.mrf.mxu0
  %v1562 = vadd.f32 0.0, %v1561
  %1563 = vmatmul.f32.gmra.mxu0 %v1507
  %v1564 = vpop.f32.mrf.mxu0
  %v1565 = vadd.f32 0.0, %v1564
  %1566 = vdwg.mxu0
  %v1567 = vadd.f32 %v1401, %v1527
  %v1568 = vadd.f32 %v1402, %v1556
  %v1569 = vadd.f32 %v1403, %v1530
  %v1570 = vadd.f32 %v1404, %v1559
  %v1571 = vadd.f32 %v1405, %v1533
  %v1572 = vadd.f32 %v1406, %v1562
  %v1573 = vadd.f32 %v1407, %v1536
  %v1574 = vadd.f32 %v1408, %v1565
  %s1575 = scalar_lea.vmem %s3, 960
  %v1576 = vld [vmem:[%s1575] sm:$0xff]
  %v1577 = vld [vmem:[%s1575 + $0x8] sm:$0xff]
  %v1578 = vld [vmem:[%s1575 + $0x10] sm:$0xff]
  %v1579 = vld [vmem:[%s1575 + $0x18] sm:$0xff]
  %v1580 = vld [vmem:[%s1575 + $0x20] sm:$0xff]
  %v1581 = vld [vmem:[%s1575 + $0x28] sm:$0xff]
  %v1582 = vld [vmem:[%s1575 + $0x30] sm:$0xff]
  %v1583 = vld [vmem:[%s1575 + $0x38] sm:$0xff]
  %v1584 = vld [vmem:[%s1575 + $0x40] sm:$0xff]
  %v1585 = vld [vmem:[%s1575 + $0x48] sm:$0xff]
  %v1586 = vld [vmem:[%s1575 + $0x50] sm:$0xff]
  %v1587 = vld [vmem:[%s1575 + $0x58] sm:$0xff]
  %v1588 = vld [vmem:[%s1575 + $0x60] sm:$0xff]
  %v1589 = vld [vmem:[%s1575 + $0x68] sm:$0xff]
  %v1590 = vld [vmem:[%s1575 + $0x70] sm:$0xff]
  %v1591 = vld [vmem:[%s1575 + $0x78] sm:$0xff]
  %v1592 = vld [vmem:[%s1575 + $0x80] sm:$0xff]
  %v1593 = vld [vmem:[%s1575 + $0x88] sm:$0xff]
  %v1594 = vld [vmem:[%s1575 + $0x90] sm:$0xff]
  %v1595 = vld [vmem:[%s1575 + $0x98] sm:$0xff]
  %v1596 = vld [vmem:[%s1575 + $0xa0] sm:$0xff]
  %v1597 = vld [vmem:[%s1575 + $0xa8] sm:$0xff]
  %v1598 = vld [vmem:[%s1575 + $0xb0] sm:$0xff]
  %v1599 = vld [vmem:[%s1575 + $0xb8] sm:$0xff]
  %v1600 = vld [vmem:[%s1575 + $0xc0] sm:$0xff]
  %v1601 = vld [vmem:[%s1575 + $0xc8] sm:$0xff]
  %v1602 = vld [vmem:[%s1575 + $0xd0] sm:$0xff]
  %v1603 = vld [vmem:[%s1575 + $0xd8] sm:$0xff]
  %v1604 = vld [vmem:[%s1575 + $0xe0] sm:$0xff]
  %v1605 = vld [vmem:[%s1575 + $0xe8] sm:$0xff]
  %1606 = vmatpush.msra.mxu0 0.0
  %1607 = vmatpush.msra.mxu0 %v1604
  %1608 = vmatpush.msra.mxu0 %v1602
  %1609 = vmatpush.msra.mxu0 %v1600
  %1610 = vmatpush.msra.mxu0 %v1598
  %1611 = vmatpush.msra.mxu0 %v1596
  %1612 = vmatpush.msra.mxu0 %v1594
  %1613 = vmatpush.msra.mxu0 %v1592
  %1614 = vmatpush.msra.mxu0 %v1590
  %1615 = vmatpush.msra.mxu0 %v1588
  %1616 = vmatpush.msra.mxu0 %v1586
  %1617 = vmatpush.msra.mxu0 %v1584
  %1618 = vmatpush.msra.mxu0 %v1582
  %1619 = vmatpush.msra.mxu0 %v1580
  %1620 = vmatpush.msra.mxu0 %v1578
  %1621 = vmatpush.msra.mxu0 %v1576
  %1622 = vmatmul.f32.gmra.mxu0 %v1061
  %v1623 = vpop.f32.mrf.mxu0
  %v1624 = vadd.f32 0.0, %v1623
  %1625 = vmatmul.f32.gmra.mxu0 %v1064
  %v1626 = vpop.f32.mrf.mxu0
  %v1627 = vadd.f32 0.0, %v1626
  %1628 = vmatmul.f32.gmra.mxu0 %v1125
  %v1629 = vpop.f32.mrf.mxu0
  %v1630 = vadd.f32 0.0, %v1629
  %1631 = vmatmul.f32.gmra.mxu0 %v1507
  %v1632 = vpop.f32.mrf.mxu0
  %v1633 = vadd.f32 0.0, %v1632
  %1634 = vdwg.mxu0
  %1635 = vmatpush.msra.mxu0 0.0
  %1636 = vmatpush.msra.mxu0 %v1605
  %1637 = vmatpush.msra.mxu0 %v1603
  %1638 = vmatpush.msra.mxu0 %v1601
  %1639 = vmatpush.msra.mxu0 %v1599
  %1640 = vmatpush.msra.mxu0 %v1597
  %1641 = vmatpush.msra.mxu0 %v1595
  %1642 = vmatpush.msra.mxu0 %v1593
  %1643 = vmatpush.msra.mxu0 %v1591
  %1644 = vmatpush.msra.mxu0 %v1589
  %1645 = vmatpush.msra.mxu0 %v1587
  %1646 = vmatpush.msra.mxu0 %v1585
  %1647 = vmatpush.msra.mxu0 %v1583
  %1648 = vmatpush.msra.mxu0 %v1581
  %1649 = vmatpush.msra.mxu0 %v1579
  %1650 = vmatpush.msra.mxu0 %v1577
  %1651 = vmatmul.f32.gmra.mxu0 %v1061
  %v1652 = vpop.f32.mrf.mxu0
  %v1653 = vadd.f32 0.0, %v1652
  %1654 = vmatmul.f32.gmra.mxu0 %v1064
  %v1655 = vpop.f32.mrf.mxu0
  %v1656 = vadd.f32 0.0, %v1655
  %1657 = vmatmul.f32.gmra.mxu0 %v1125
  %v1658 = vpop.f32.mrf.mxu0
  %v1659 = vadd.f32 0.0, %v1658
  %1660 = vmatmul.f32.gmra.mxu0 %v1507
  %v1661 = vpop.f32.mrf.mxu0
  %v1662 = vadd.f32 0.0, %v1661
  %1663 = vdwg.mxu0
  %v1664 = vadd.f32 %v1498, %v1624
  %v1665 = vadd.f32 %v1499, %v1653
  %v1666 = vadd.f32 %v1500, %v1627
  %v1667 = vadd.f32 %v1501, %v1656
  %v1668 = vadd.f32 %v1502, %v1630
  %v1669 = vadd.f32 %v1503, %v1659
  %v1670 = vadd.f32 %v1504, %v1633
  %v1671 = vadd.f32 %v1505, %v1662
  %v1673 = vsel %vm983, %v921, 0
  %1675 = vmatpush.msra.mxu0 0.0
  %1676 = vmatpush.msra.mxu0 %v1604
  %1677 = vmatpush.msra.mxu0 %v1602
  %1678 = vmatpush.msra.mxu0 %v1600
  %1679 = vmatpush.msra.mxu0 %v1598
  %1680 = vmatpush.msra.mxu0 %v1596
  %1681 = vmatpush.msra.mxu0 %v1594
  %1682 = vmatpush.msra.mxu0 %v1592
  %1683 = vmatpush.msra.mxu0 %v1590
  %1684 = vmatpush.msra.mxu0 %v1588
  %1685 = vmatpush.msra.mxu0 %v1586
  %1686 = vmatpush.msra.mxu0 %v1584
  %1687 = vmatpush.msra.mxu0 %v1582
  %1688 = vmatpush.msra.mxu0 %v1580
  %1689 = vmatpush.msra.mxu0 %v1578
  %1690 = vmatpush.msra.mxu0 %v1576
  %1691 = vmatmul.f32.gmra.mxu0 %v991
  %v1692 = vpop.f32.mrf.mxu0
  %v1693 = vadd.f32 0.0, %v1692
  %1694 = vmatmul.f32.gmra.mxu0 %v994
  %v1695 = vpop.f32.mrf.mxu0
  %v1696 = vadd.f32 0.0, %v1695
  %1697 = vmatmul.f32.gmra.mxu0 %v1341
  %v1698 = vpop.f32.mrf.mxu0
  %v1699 = vadd.f32 0.0, %v1698
  %1700 = vmatmul.f32.gmra.mxu0 %v1673
  %v1701 = vpop.f32.mrf.mxu0
  %v1702 = vadd.f32 0.0, %v1701
  %1703 = vdwg.mxu0
  %1704 = vmatpush.msra.mxu0 0.0
  %1705 = vmatpush.msra.mxu0 %v1605
  %1706 = vmatpush.msra.mxu0 %v1603
  %1707 = vmatpush.msra.mxu0 %v1601
  %1708 = vmatpush.msra.mxu0 %v1599
  %1709 = vmatpush.msra.mxu0 %v1597
  %1710 = vmatpush.msra.mxu0 %v1595
  %1711 = vmatpush.msra.mxu0 %v1593
  %1712 = vmatpush.msra.mxu0 %v1591
  %1713 = vmatpush.msra.mxu0 %v1589
  %1714 = vmatpush.msra.mxu0 %v1587
  %1715 = vmatpush.msra.mxu0 %v1585
  %1716 = vmatpush.msra.mxu0 %v1583
  %1717 = vmatpush.msra.mxu0 %v1581
  %1718 = vmatpush.msra.mxu0 %v1579
  %1719 = vmatpush.msra.mxu0 %v1577
  %1720 = vmatmul.f32.gmra.mxu0 %v991
  %v1721 = vpop.f32.mrf.mxu0
  %v1722 = vadd.f32 0.0, %v1721
  %1723 = vmatmul.f32.gmra.mxu0 %v994
  %v1724 = vpop.f32.mrf.mxu0
  %v1725 = vadd.f32 0.0, %v1724
  %1726 = vmatmul.f32.gmra.mxu0 %v1341
  %v1727 = vpop.f32.mrf.mxu0
  %v1728 = vadd.f32 0.0, %v1727
  %1729 = vmatmul.f32.gmra.mxu0 %v1673
  %v1730 = vpop.f32.mrf.mxu0
  %v1731 = vadd.f32 0.0, %v1730
  %1732 = vdwg.mxu0
  %v1733 = vadd.f32 %v1567, %v1693
  %v1734 = vadd.f32 %v1568, %v1722
  %v1735 = vadd.f32 %v1569, %v1696
  %v1736 = vadd.f32 %v1570, %v1725
  %v1737 = vadd.f32 %v1571, %v1699
  %v1738 = vadd.f32 %v1572, %v1728
  %v1739 = vadd.f32 %v1573, %v1702
  %v1740 = vadd.f32 %v1574, %v1731
  %v1741 = vmax.f32 %v1664, %v1733
  %v1742 = vmax.f32 %v1665, %v1734
  %v1743 = vmax.f32 %v1666, %v1735
  %v1744 = vmax.f32 %v1667, %v1736
  %v1745 = vmax.f32 %v1668, %v1737
  %v1746 = vmax.f32 %v1669, %v1738
  %v1747 = vmax.f32 %v1670, %v1739
  %v1748 = vmax.f32 %v1671, %v1740
  %v1749 = vld [vmem:[%s4] sm:$0x3]
  %v1751 = vperm.slane %v1749, 0
  %v1752 = vperm.slane %v1749, 1
  %v1755 = vadd.f32 %v1741, %v1751
  %v1756 = vadd.f32 %v1742, %v1752
  %v1757 = vadd.f32 %v1743, %v1751
  %v1758 = vadd.f32 %v1744, %v1752
  %v1759 = vadd.f32 %v1745, %v1751
  %v1760 = vadd.f32 %v1746, %v1752
  %v1761 = vadd.f32 %v1747, %v1751
  %v1762 = vadd.f32 %v1748, %v1752
  %v1763 = vld [vmem:[%s6] sm:$0xff]
  %v1764 = vld [vmem:[%s6 + $0x8] sm:$0xff]
  %v1765 = vld [vmem:[%s6 + $0x10] sm:$0xff]
  %v1766 = vld [vmem:[%s6 + $0x18] sm:$0xff]
  %v1767 = vld [vmem:[%s6 + $0x20] sm:$0xff]
  %v1768 = vld [vmem:[%s6 + $0x28] sm:$0xff]
  %v1769 = vld [vmem:[%s6 + $0x30] sm:$0xff]
  %v1770 = vld [vmem:[%s6 + $0x38] sm:$0xff]
  %v1771 = vld [vmem:[%s6 + $0x40] sm:$0xff]
  %v1772 = vld [vmem:[%s6 + $0x48] sm:$0xff]
  %v1773 = vld [vmem:[%s6 + $0x50] sm:$0xff]
  %v1774 = vld [vmem:[%s6 + $0x58] sm:$0xff]
  %v1775 = vld [vmem:[%s6 + $0x60] sm:$0xff]
  %v1776 = vld [vmem:[%s6 + $0x68] sm:$0xff]
  %v1777 = vld [vmem:[%s6 + $0x70] sm:$0xff]
  %v1778 = vld [vmem:[%s6 + $0x78] sm:$0xff]
  %v1779 = vld [vmem:[%s6 + $0x80] sm:$0xff]
  %v1780 = vld [vmem:[%s6 + $0x88] sm:$0xff]
  %v1781 = vld [vmem:[%s6 + $0x90] sm:$0xff]
  %v1782 = vld [vmem:[%s6 + $0x98] sm:$0xff]
  %vm1783 = vcmask 261120
  %v1785 = vsel %vm1783, %v1756, 0
  %v1788 = vsel %vm1783, %v1758, 0
  %v1791 = vsel %vm1783, %v1760, 0
  %v1794 = vsel %vm1783, %v1762, 0
  %1796 = vmatpush.msra.mxu0 %v1778
  %1797 = vmatpush.msra.mxu0 %v1777
  %1798 = vmatpush.msra.mxu0 %v1776
  %1799 = vmatpush.msra.mxu0 %v1775
  %1800 = vmatpush.msra.mxu0 %v1774
  %1801 = vmatpush.msra.mxu0 %v1773
  %1802 = vmatpush.msra.mxu0 %v1772
  %1803 = vmatpush.msra.mxu0 %v1771
  %1804 = vmatpush.msra.mxu0 %v1770
  %1805 = vmatpush.msra.mxu0 %v1769
  %1806 = vmatpush.msra.mxu0 %v1768
  %1807 = vmatpush.msra.mxu0 %v1767
  %1808 = vmatpush.msra.mxu0 %v1766
  %1809 = vmatpush.msra.mxu0 %v1765
  %1810 = vmatpush.msra.mxu0 %v1764
  %1811 = vmatpush.msra.mxu0 %v1763
  %1812 = vmatmul.f32.gmra.mxu0 %v1755
  %v1813 = vpop.f32.mrf.mxu0
  %v1814 = vadd.f32 0.0, %v1813
  %1815 = vmatmul.f32.gmra.mxu0 %v1757
  %v1816 = vpop.f32.mrf.mxu0
  %v1817 = vadd.f32 0.0, %v1816
  %1818 = vmatmul.f32.gmra.mxu0 %v1759
  %v1819 = vpop.f32.mrf.mxu0
  %v1820 = vadd.f32 0.0, %v1819
  %1821 = vmatmul.f32.gmra.mxu0 %v1761
  %v1822 = vpop.f32.mrf.mxu0
  %v1823 = vadd.f32 0.0, %v1822
  %1824 = vdwg.mxu0
  %1825 = vmatpush.msra.mxu0 0.0
  %1826 = vmatpush.msra.mxu0 0.0
  %1827 = vmatpush.msra.mxu0 0.0
  %1828 = vmatpush.msra.mxu0 0.0
  %1829 = vmatpush.msra.mxu0 0.0
  %1830 = vmatpush.msra.mxu0 0.0
  %1831 = vmatpush.msra.mxu0 0.0
  %1832 = vmatpush.msra.mxu0 0.0
  %1833 = vmatpush.msra.mxu0 0.0
  %1834 = vmatpush.msra.mxu0 0.0
  %1835 = vmatpush.msra.mxu0 0.0
  %1836 = vmatpush.msra.mxu0 0.0
  %1837 = vmatpush.msra.mxu0 %v1782
  %1838 = vmatpush.msra.mxu0 %v1781
  %1839 = vmatpush.msra.mxu0 %v1780
  %1840 = vmatpush.msra.mxu0 %v1779
  %1841 = vmatmul.f32.gmra.mxu0 %v1785
  %v1842 = vpop.f32.mrf.mxu0
  %v1843 = vadd.f32 %v1814, %v1842
  %1844 = vmatmul.f32.gmra.mxu0 %v1788
  %v1845 = vpop.f32.mrf.mxu0
  %v1846 = vadd.f32 %v1817, %v1845
  %1847 = vmatmul.f32.gmra.mxu0 %v1791
  %v1848 = vpop.f32.mrf.mxu0
  %v1849 = vadd.f32 %v1820, %v1848
  %1850 = vmatmul.f32.gmra.mxu0 %v1794
  %v1851 = vpop.f32.mrf.mxu0
  %v1852 = vadd.f32 %v1823, %v1851
  %1853 = vdwg.mxu0
  %s1854 = scalar_lea.vmem %s6, 160
  %v1855 = vld [vmem:[%s1854] sm:$0xff]
  %v1856 = vld [vmem:[%s1854 + $0x8] sm:$0xff]
  %v1857 = vld [vmem:[%s1854 + $0x10] sm:$0xff]
  %v1858 = vld [vmem:[%s1854 + $0x18] sm:$0xff]
  %v1859 = vld [vmem:[%s1854 + $0x20] sm:$0xff]
  %v1860 = vld [vmem:[%s1854 + $0x28] sm:$0xff]
  %v1861 = vld [vmem:[%s1854 + $0x30] sm:$0xff]
  %v1862 = vld [vmem:[%s1854 + $0x38] sm:$0xff]
  %v1863 = vld [vmem:[%s1854 + $0x40] sm:$0xff]
  %v1864 = vld [vmem:[%s1854 + $0x48] sm:$0xff]
  %v1865 = vld [vmem:[%s1854 + $0x50] sm:$0xff]
  %v1866 = vld [vmem:[%s1854 + $0x58] sm:$0xff]
  %v1867 = vld [vmem:[%s1854 + $0x60] sm:$0xff]
  %v1868 = vld [vmem:[%s1854 + $0x68] sm:$0xff]
  %v1869 = vld [vmem:[%s1854 + $0x70] sm:$0xff]
  %v1870 = vld [vmem:[%s1854 + $0x78] sm:$0xff]
  %v1871 = vld [vmem:[%s1854 + $0x80] sm:$0xff]
  %v1872 = vld [vmem:[%s1854 + $0x88] sm:$0xff]
  %v1873 = vld [vmem:[%s1854 + $0x90] sm:$0xff]
  %v1874 = vld [vmem:[%s1854 + $0x98] sm:$0xff]
  %1875 = vmatpush.msra.mxu0 %v1870
  %1876 = vmatpush.msra.mxu0 %v1869
  %1877 = vmatpush.msra.mxu0 %v1868
  %1878 = vmatpush.msra.mxu0 %v1867
  %1879 = vmatpush.msra.mxu0 %v1866
  %1880 = vmatpush.msra.mxu0 %v1865
  %1881 = vmatpush.msra.mxu0 %v1864
  %1882 = vmatpush.msra.mxu0 %v1863
  %1883 = vmatpush.msra.mxu0 %v1862
  %1884 = vmatpush.msra.mxu0 %v1861
  %1885 = vmatpush.msra.mxu0 %v1860
  %1886 = vmatpush.msra.mxu0 %v1859
  %1887 = vmatpush.msra.mxu0 %v1858
  %1888 = vmatpush.msra.mxu0 %v1857
  %1889 = vmatpush.msra.mxu0 %v1856
  %1890 = vmatpush.msra.mxu0 %v1855
  %1891 = vmatmul.f32.gmra.mxu0 %v1755
  %v1892 = vpop.f32.mrf.mxu0
  %v1893 = vadd.f32 0.0, %v1892
  %1894 = vmatmul.f32.gmra.mxu0 %v1757
  %v1895 = vpop.f32.mrf.mxu0
  %v1896 = vadd.f32 0.0, %v1895
  %1897 = vmatmul.f32.gmra.mxu0 %v1759
  %v1898 = vpop.f32.mrf.mxu0
  %v1899 = vadd.f32 0.0, %v1898
  %1900 = vmatmul.f32.gmra.mxu0 %v1761
  %v1901 = vpop.f32.mrf.mxu0
  %v1902 = vadd.f32 0.0, %v1901
  %1903 = vdwg.mxu0
  %1904 = vmatpush.msra.mxu0 0.0
  %1905 = vmatpush.msra.mxu0 0.0
  %1906 = vmatpush.msra.mxu0 0.0
  %1907 = vmatpush.msra.mxu0 0.0
  %1908 = vmatpush.msra.mxu0 0.0
  %1909 = vmatpush.msra.mxu0 0.0
  %1910 = vmatpush.msra.mxu0 0.0
  %1911 = vmatpush.msra.mxu0 0.0
  %1912 = vmatpush.msra.mxu0 0.0
  %1913 = vmatpush.msra.mxu0 0.0
  %1914 = vmatpush.msra.mxu0 0.0
  %1915 = vmatpush.msra.mxu0 0.0
  %1916 = vmatpush.msra.mxu0 %v1874
  %1917 = vmatpush.msra.mxu0 %v1873
  %1918 = vmatpush.msra.mxu0 %v1872
  %1919 = vmatpush.msra.mxu0 %v1871
  %1920 = vmatmul.f32.gmra.mxu0 %v1785
  %v1921 = vpop.f32.mrf.mxu0
  %v1922 = vadd.f32 %v1893, %v1921
  %1923 = vmatmul.f32.gmra.mxu0 %v1788
  %v1924 = vpop.f32.mrf.mxu0
  %v1925 = vadd.f32 %v1896, %v1924
  %1926 = vmatmul.f32.gmra.mxu0 %v1791
  %v1927 = vpop.f32.mrf.mxu0
  %v1928 = vadd.f32 %v1899, %v1927
  %1929 = vmatmul.f32.gmra.mxu0 %v1794
  %v1930 = vpop.f32.mrf.mxu0
  %v1931 = vadd.f32 %v1902, %v1930
  %1932 = vdwg.mxu0
  %v1933 = vmax.f32 %v1843, %v1922
  %v1934 = vmax.f32 %v1846, %v1925
  %v1935 = vmax.f32 %v1849, %v1928
  %v1936 = vmax.f32 %v1852, %v1931
  %v1937 = vmax.f32 %v1933, 0.0
  %v1938 = vmax.f32 %v1934, 0.0
  %v1939 = vmax.f32 %v1935, 0.0
  %v1940 = vmax.f32 %v1936, 0.0
  %v1941 = vld [vmem:[%s7] sm:$0xff]
  %v1942 = vld [vmem:[%s7 + $0x8] sm:$0xff]
  %v1943 = vld [vmem:[%s7 + $0x10] sm:$0xff]
  %v1944 = vld [vmem:[%s7 + $0x18] sm:$0xff]
  %v1945 = vld [vmem:[%s7 + $0x20] sm:$0xff]
  %v1946 = vld [vmem:[%s7 + $0x28] sm:$0xff]
  %v1947 = vld [vmem:[%s7 + $0x30] sm:$0xff]
  %v1948 = vld [vmem:[%s7 + $0x38] sm:$0xff]
  %v1949 = vld [vmem:[%s7 + $0x40] sm:$0xff]
  %v1950 = vld [vmem:[%s7 + $0x48] sm:$0xff]
  %s1951 = scalar_lea.vmem %s7, 80
  %v1952 = vld [vmem:[%s1951] sm:$0xff]
  %v1953 = vld [vmem:[%s1951 + $0x8] sm:$0xff]
  %v1954 = vld [vmem:[%s1951 + $0x10] sm:$0xff]
  %v1955 = vld [vmem:[%s1951 + $0x18] sm:$0xff]
  %v1956 = vld [vmem:[%s1951 + $0x20] sm:$0xff]
  %v1957 = vld [vmem:[%s1951 + $0x28] sm:$0xff]
  %v1958 = vld [vmem:[%s1951 + $0x30] sm:$0xff]
  %v1959 = vld [vmem:[%s1951 + $0x38] sm:$0xff]
  %v1960 = vld [vmem:[%s1951 + $0x40] sm:$0xff]
  %v1961 = vld [vmem:[%s1951 + $0x48] sm:$0xff]
  %vm1962 = vcmask 654336
  %v1964 = vsel %vm1962, %v1938, 0
  %1966 = vmatpush.msra.mxu0 0.0
  %1967 = vmatpush.msra.mxu0 0.0
  %1968 = vmatpush.msra.mxu0 0.0
  %1969 = vmatpush.msra.mxu0 0.0
  %1970 = vmatpush.msra.mxu0 0.0
  %1971 = vmatpush.msra.mxu0 0.0
  %1972 = vmatpush.msra.mxu0 %v1961
  %1973 = vmatpush.msra.mxu0 %v1960
  %1974 = vmatpush.msra.mxu0 %v1959
  %1975 = vmatpush.msra.mxu0 %v1958
  %1976 = vmatpush.msra.mxu0 %v1957
  %1977 = vmatpush.msra.mxu0 %v1956
  %1978 = vmatpush.msra.mxu0 %v1955
  %1979 = vmatpush.msra.mxu0 %v1954
  %1980 = vmatpush.msra.mxu0 %v1953
  %1981 = vmatpush.msra.mxu0 %v1952
  %1982 = vmatmul.f32.gmra.mxu0 %v1964
  %v1983 = vpop.f32.mrf.mxu0
  %v1984 = vadd.f32 0.0, %v1983
  %1985 = vdwg.mxu0
  %v1987 = vsel %vm1962, %v1937, 0
  %1989 = vmatpush.msra.mxu0 0.0
  %1990 = vmatpush.msra.mxu0 0.0
  %1991 = vmatpush.msra.mxu0 0.0
  %1992 = vmatpush.msra.mxu0 0.0
  %1993 = vmatpush.msra.mxu0 0.0
  %1994 = vmatpush.msra.mxu0 0.0
  %1995 = vmatpush.msra.mxu0 %v1950
  %1996 = vmatpush.msra.mxu0 %v1949
  %1997 = vmatpush.msra.mxu0 %v1948
  %1998 = vmatpush.msra.mxu0 %v1947
  %1999 = vmatpush.msra.mxu0 %v1946
  %2000 = vmatpush.msra.mxu0 %v1945
  %2001 = vmatpush.msra.mxu0 %v1944
  %2002 = vmatpush.msra.mxu0 %v1943
  %2003 = vmatpush.msra.mxu0 %v1942
  %2004 = vmatpush.msra.mxu0 %v1941
  %2005 = vmatmul.f32.gmra.mxu0 %v1987
  %v2006 = vpop.f32.mrf.mxu0
  %v2007 = vadd.f32 %v1984, %v2006
  %2008 = vdwg.mxu0
  %s2009 = scalar_lea.vmem %s7, 160
  %v2010 = vld [vmem:[%s2009] sm:$0xff]
  %v2011 = vld [vmem:[%s2009 + $0x8] sm:$0xff]
  %v2012 = vld [vmem:[%s2009 + $0x10] sm:$0xff]
  %v2013 = vld [vmem:[%s2009 + $0x18] sm:$0xff]
  %v2014 = vld [vmem:[%s2009 + $0x20] sm:$0xff]
  %v2015 = vld [vmem:[%s2009 + $0x28] sm:$0xff]
  %v2016 = vld [vmem:[%s2009 + $0x30] sm:$0xff]
  %v2017 = vld [vmem:[%s2009 + $0x38] sm:$0xff]
  %v2018 = vld [vmem:[%s2009 + $0x40] sm:$0xff]
  %v2019 = vld [vmem:[%s2009 + $0x48] sm:$0xff]
  %v2021 = vsel %vm1962, %v1939, 0
  %2023 = vmatpush.msra.mxu0 0.0
  %2024 = vmatpush.msra.mxu0 0.0
  %2025 = vmatpush.msra.mxu0 0.0
  %2026 = vmatpush.msra.mxu0 0.0
  %2027 = vmatpush.msra.mxu0 0.0
  %2028 = vmatpush.msra.mxu0 0.0
  %2029 = vmatpush.msra.mxu0 %v2019
  %2030 = vmatpush.msra.mxu0 %v2018
  %2031 = vmatpush.msra.mxu0 %v2017
  %2032 = vmatpush.msra.mxu0 %v2016
  %2033 = vmatpush.msra.mxu0 %v2015
  %2034 = vmatpush.msra.mxu0 %v2014
  %2035 = vmatpush.msra.mxu0 %v2013
  %2036 = vmatpush.msra.mxu0 %v2012
  %2037 = vmatpush.msra.mxu0 %v2011
  %2038 = vmatpush.msra.mxu0 %v2010
  %2039 = vmatmul.f32.gmra.mxu0 %v2021
  %v2040 = vpop.f32.mrf.mxu0
  %v2041 = vadd.f32 0.0, %v2040
  %2042 = vdwg.mxu0
  %v2043 = vadd.f32 %v2007, %v2041
  %s2044 = scalar_lea.vmem %s7, 240
  %v2045 = vld [vmem:[%s2044] sm:$0xff]
  %v2046 = vld [vmem:[%s2044 + $0x8] sm:$0xff]
  %v2047 = vld [vmem:[%s2044 + $0x10] sm:$0xff]
  %v2048 = vld [vmem:[%s2044 + $0x18] sm:$0xff]
  %v2049 = vld [vmem:[%s2044 + $0x20] sm:$0xff]
  %v2050 = vld [vmem:[%s2044 + $0x28] sm:$0xff]
  %v2051 = vld [vmem:[%s2044 + $0x30] sm:$0xff]
  %v2052 = vld [vmem:[%s2044 + $0x38] sm:$0xff]
  %v2053 = vld [vmem:[%s2044 + $0x40] sm:$0xff]
  %v2054 = vld [vmem:[%s2044 + $0x48] sm:$0xff]
  %v2056 = vsel %vm1962, %v1940, 0
  %2058 = vmatpush.msra.mxu0 0.0
  %2059 = vmatpush.msra.mxu0 0.0
  %2060 = vmatpush.msra.mxu0 0.0
  %2061 = vmatpush.msra.mxu0 0.0
  %2062 = vmatpush.msra.mxu0 0.0
  %2063 = vmatpush.msra.mxu0 0.0
  %2064 = vmatpush.msra.mxu0 %v2054
  %2065 = vmatpush.msra.mxu0 %v2053
  %2066 = vmatpush.msra.mxu0 %v2052
  %2067 = vmatpush.msra.mxu0 %v2051
  %2068 = vmatpush.msra.mxu0 %v2050
  %2069 = vmatpush.msra.mxu0 %v2049
  %2070 = vmatpush.msra.mxu0 %v2048
  %2071 = vmatpush.msra.mxu0 %v2047
  %2072 = vmatpush.msra.mxu0 %v2046
  %2073 = vmatpush.msra.mxu0 %v2045
  %2074 = vmatmul.f32.gmra.mxu0 %v2056
  %v2075 = vpop.f32.mrf.mxu0
  %v2076 = vadd.f32 0.0, %v2075
  %2077 = vdwg.mxu0
  %v2078 = vadd.f32 %v2043, %v2076
  %v2079 = vld [vmem:[%s8] sm:$0x1]
  %v2081 = vperm.slane %v2079, 0
  %v2083 = vadd.f32 %v2078, %v2081
  %v2084 = vmax.f32 %v2083, 0.0
  %v2085 = vld [vmem:[%s9] sm:$0xff]
  %v2086 = vld [vmem:[%s9 + $0x8] sm:$0xff]
  %v2087 = vld [vmem:[%s9 + $0x10] sm:$0xff]
  %v2088 = vld [vmem:[%s9 + $0x18] sm:$0xff]
  %v2089 = vld [vmem:[%s9 + $0x20] sm:$0xff]
  %v2090 = vld [vmem:[%s9 + $0x28] sm:$0xff]
  %v2091 = vld [vmem:[%s9 + $0x30] sm:$0x3]
  %v2092 = vld [vmem:[%s10] sm:$0x1]
  %v2094 = vperm.slane %v2092, 0
  %vm2096 = vcmask 408576
  %v2098 = vsel %vm2096, %v2084, 0
  %vm2100 = vcmask 1041408
  %v2102 = vsel %vm2100, %v2091, 0
  %2104 = vmatpush.msra.mxu0 0.0
  %2105 = vmatpush.msra.mxu0 0.0
  %2106 = vmatpush.msra.mxu0 0.0
  %2107 = vmatpush.msra.mxu0 0.0
  %2108 = vmatpush.msra.mxu0 0.0
  %2109 = vmatpush.msra.mxu0 0.0
  %2110 = vmatpush.msra.mxu0 0.0
  %2111 = vmatpush.msra.mxu0 0.0
  %2112 = vmatpush.msra.mxu0 0.0
  %2113 = vmatpush.msra.mxu0 %v2102
  %2114 = vmatpush.msra.mxu0 %v2090
  %2115 = vmatpush.msra.mxu0 %v2089
  %2116 = vmatpush.msra.mxu0 %v2088
  %2117 = vmatpush.msra.mxu0 %v2087
  %2118 = vmatpush.msra.mxu0 %v2086
  %2119 = vmatpush.msra.mxu0 %v2085
  %2120 = vmatmul.f32.gmra.mxu0 %v2098
  %v2121 = vpop.f32.mrf.mxu0
  %v2122 = vadd.f32 %v2094, %v2121
  %2123 = vdwg.mxu0
  %2124 = vmax.xlane.f32.xlu0 %v2122
  %v2125 = vpop.xlane.xlu0 %2124
  %v2126 = vsub.f32 %v2122, %v2125
  %v2127 = vmul.f32 %v2126, 1.442695
  %v2128 = vpow.pop %v2127
  %2129 = vadd.xlane.f32.xlu0 %v2128
  %v2130 = vpop.xlane.xlu0 %2129
  %v2131 = vlog2.pop %v2130
  %v2132 = vmul.f32 %v2131, 0.6931472
  %v2133 = vsub.f32 %v2126, %v2132
  %2134 = vst [vmem:[%s11] sm:$0xff] %v2133
  // Predicated region
  $region46: #{net_forward.1} parent=0 // pred_check
    _
  $region47: #{net_forward.1} parent=0 // pred_check_branch
    %2136 = sbr.rel (0) target = $region49
  $region48: #{net_forward.1} parent=0 // pred_region
    _
  $region49: #{net_forward.1} parent=0 // pred_fallthru
    _
  // Predicated region
  $region50: #{net_forward.1} parent=0 // pred_check
    _
  $region51: #{net_forward.1} parent=0 // pred_check_branch
    %2138 = sbr.rel (0) target = $region53
  $region52: #{net_forward.1} parent=0 // pred_region
    _
  $region53: #{net_forward.1} parent=0 // pred_fallthru
    _

</llo_original>
